<compile_context>
chip_gen: v7x
topology: tpu7x:2x2x1
jax: 0.10.0
libtpu: 0.0.40
codegen_flags: <defaults>
</compile_context>

<pallas_src>
import math

import jax
import jax.numpy as jnp
from jax.experimental import pallas as pl
from jax.experimental.pallas import tpu as pltpu


# ----------------------------------------------------------------------------- kernel
def make_actor_kernel(num_in, cw):
    """num_in: branch-slab width (2048); cw: common lane width for fc/out (128)."""

    def actor_kernel(x_ref, wx_ref, w2_ref, bias_ref, out_ref):
        f32, bf16 = jnp.float32, jnp.bfloat16

        # static (free) slices of the packed f32 bias buffer
        bb = bias_ref[:, 0:num_in]                         # branch-slab bias
        bfc = bias_ref[:, num_in:num_in + cw]              # fullyConnected bias
        bout = bias_ref[:, num_in + cw:num_in + 2 * cw]    # output bias (-1e30 pad)

        # branch layer: one dense matmul (flattened state) -> 2048-wide slab
        x = x_ref[...].astype(bf16)                                       # (8, 48)
        slab = jnp.dot(x, wx_ref[...], preferred_element_type=f32) + bb
        slab = jnp.maximum(slab, 0.0)                                     # (8, 2048)

        # fullyConnected: rows [0:num_in) of the packed W2 buffer
        fc = jnp.dot(slab.astype(bf16), w2_ref[0:num_in, :],
                     preferred_element_type=f32) + bfc
        fc = jnp.maximum(fc, 0.0)                                         # (8, cw)

        # outputLayer: rows [num_in:num_in+cw) of W2; padded lanes have -1e30 bias
        logits = jnp.dot(fc.astype(bf16), w2_ref[num_in:num_in + cw, :],
                         preferred_element_type=f32) + bout               # (8, cw)

        # softmax over the lane dim (padded lanes exp-underflow to exactly 0)
        m = jnp.max(logits, axis=-1, keepdims=True)
        e = jnp.exp(logits - m)
        s = jnp.sum(e, axis=-1, keepdims=True)
        out_ref[...] = e / s                                              # exact divide

    return actor_kernel


# ----------------------------------------------------------------------------- params
def make_params(key, state_dim, action_dim, n_conv, n_fc, n_fc1):
    S1 = state_dim[1]
    L1 = S1 - 3
    L2 = action_dim - 3
    num_fc_in = 2 * n_conv * L1 + 3 * n_fc + n_conv * L2
    ks = jax.random.split(key, 9)

    def xavier_uniform(k, shape, fan_in, fan_out):
        a = math.sqrt(6.0 / (fan_in + fan_out))
        return jax.random.uniform(k, shape, jnp.float32, -a, a)

    def xavier_normal(k, shape, fan_in, fan_out):
        std = math.sqrt(2.0 / (fan_in + fan_out))
        return std * jax.random.normal(k, shape, jnp.float32)

    p = {}
    # Conv1d(1, C, 4): weight (C, 1, 4), bias 0
    p["tconv_w"] = xavier_uniform(ks[0], (n_conv, 1, 4), 4, 4 * n_conv)
    p["tconv_b"] = jnp.zeros((n_conv,), jnp.float32)
    p["dconv_w"] = xavier_uniform(ks[1], (n_conv, 1, 4), 4, 4 * n_conv)
    p["dconv_b"] = jnp.zeros((n_conv,), jnp.float32)
    p["cconv_w"] = xavier_normal(ks[2], (n_conv, 1, 4), 4, 4 * n_conv)
    p["cconv_b"] = jnp.zeros((n_conv,), jnp.float32)
    # Linear(1, F): weight (F, 1), bias 0
    p["bitrate_w"] = xavier_uniform(ks[3], (n_fc, 1), 1, n_fc)
    p["bitrate_b"] = jnp.zeros((n_fc,), jnp.float32)
    p["buffer_w"] = xavier_uniform(ks[4], (n_fc, 1), 1, n_fc)
    p["buffer_b"] = jnp.zeros((n_fc,), jnp.float32)
    p["left_w"] = xavier_uniform(ks[5], (n_fc, 1), 1, n_fc)
    p["left_b"] = jnp.zeros((n_fc,), jnp.float32)
    # fullyConnected: (H, num_fc_in), bias 0
    p["fc_w"] = xavier_uniform(ks[6], (n_fc1, num_fc_in), num_fc_in, n_fc1)
    p["fc_b"] = jnp.zeros((n_fc1,), jnp.float32)
    # outputLayer: PyTorch default init
    bound = 1.0 / math.sqrt(n_fc1)
    p["out_w"] = jax.random.uniform(ks[7], (action_dim, n_fc1), jnp.float32,
                                    -bound, bound)
    p["out_b"] = jax.random.uniform(ks[8], (action_dim,), jnp.float32,
                                    -bound, bound)
    return p


# ----------------------------------------------------------------------------- packing (runs ONCE at init)
def pack_params(p, state_dim, action_dim, n_conv, n_fc, n_fc1, b_pad=8):
    S0, S1 = state_dim
    L1 = S1 - 3
    L2 = action_dim - 3
    C, F, H = n_conv, n_fc, n_fc1
    num_in = 3 * F + 2 * C * L1 + C * L2              # branch-slab width (2048)
    s_flat = S0 * S1                                  # flattened state width (48)
    cw = max(-(-H // 128) * 128, -(-action_dim // 128) * 128)   # lane width (128)
    f32 = jnp.float32

    # ---- Wx: direct (flattened state) -> (branch slab) weight. Every entry is a
    #      single branch-weight value re-scattered (patches never self-overlap for a
    #      fixed output column), so this is numerically exact.
    #      Slab column order: [bitrate | buffer | leftChunk | tConv(l-major) | dConv | cConv]
    Wx = jnp.zeros((s_flat, num_in), f32)
    Wx = Wx.at[0 * S1 + S1 - 1, 0:F].set(p["bitrate_w"][:, 0])       # x[:,0,-1]
    Wx = Wx.at[1 * S1 + S1 - 1, F:2 * F].set(p["buffer_w"][:, 0])    # x[:,1,-1]
    Wx = Wx.at[5 * S1 + S1 - 1, 2 * F:3 * F].set(p["left_w"][:, 0])  # x[:,5,-1]
    col = 3 * F
    for ch, w4, L in ((2, p["tconv_w"], L1), (3, p["dconv_w"], L1),
                      (4, p["cconv_w"], L2)):
        for l in range(L):
            for k in range(4):
                Wx = Wx.at[ch * S1 + l + k, col:col + C].set(w4[:, 0, k])
            col += C

    # branch bias, in slab order
    bb = jnp.concatenate(
        [p["bitrate_b"], p["buffer_b"], p["left_b"],
         jnp.tile(p["tconv_b"], L1), jnp.tile(p["dconv_b"], L1),
         jnp.tile(p["cconv_b"], L2)])

    # ---- fullyConnected: permute rows from torch concat order (channel-major conv
    #      flatten, leftChunk last) to the slab order, pad columns to cw.
    o_t = 2 * F
    o_d = o_t + C * L1
    o_c = o_d + C * L1
    o_lc = o_c + C * L2
    perm = list(range(2 * F)) + list(range(o_lc, o_lc + F))
    for off, L in ((o_t, L1), (o_d, L1), (o_c, L2)):
        perm += [off + c * L + l for l in range(L) for c in range(C)]
    perm = jnp.asarray(perm, jnp.int32)
    Wfc = jnp.zeros((num_in, cw), f32).at[:, :H].set(p["fc_w"].T[perm])
    bfc = jnp.zeros((cw,), f32).at[:H].set(p["fc_b"])

    # ---- output layer, lane-padded; padded lanes get -1e30 bias (kept f32) so the
    #      in-kernel softmax sends them to exactly 0.
    Wout = jnp.zeros((cw, cw), f32).at[:H, :action_dim].set(p["out_w"].T)
    bout = jnp.full((cw,), -1e30, f32).at[:action_dim].set(p["out_b"])

    bf16 = jnp.bfloat16
    packed = {
        "wx": Wx.astype(bf16),                                     # (s_flat, num_in)
        "w2": jnp.concatenate([Wfc, Wout], axis=0).astype(bf16),   # (num_in+cw, cw)
        "bias": jnp.concatenate([bb, bfc, bout])[None, :],         # (1, num_in+2cw) f32
    }
    cfg = dict(num_in=num_in, cw=cw, s_flat=s_flat, b_pad=b_pad,
               action_dim=action_dim)
    return packed, cfg


# ----------------------------------------------------------------------------- wrapper
def build_actor_forward(cfg):
    num_in = cfg["num_in"]
    cw = cfg["cw"]
    s_flat = cfg["s_flat"]
    b_pad = cfg["b_pad"]
    action_dim = cfg["action_dim"]

    kernel = make_actor_kernel(num_in, cw)
    cost = pl.CostEstimate(
        flops=2 * b_pad * (s_flat * num_in + num_in * cw + cw * cw),
        transcendentals=b_pad * cw,
        bytes_accessed=(2 * (s_flat * num_in + (num_in + cw) * cw)   # bf16 weights
                        + 4 * (num_in + 2 * cw)                      # f32 biases
                        + 4 * b_pad * (s_flat + cw)),                # x_in + out
    )
    vmem = pl.BlockSpec(memory_space=pltpu.MemorySpace.VMEM)

    # Single invocation, no grid: ~0.8 MB of bf16 weights fits VMEM on all
    # generations; any grid step (~0.35 us) would exceed the kernel's compute.
    call = pl.pallas_call(
        kernel,
        out_shape=jax.ShapeDtypeStruct((b_pad, cw), jnp.float32),
        in_specs=[vmem, vmem, vmem, vmem],
        out_specs=vmem,
        cost_estimate=cost,
    )
    # TODO(synk): for large batches (>= ~512 rows) add a batch grid with
    # dimension_semantics=("parallel",) so both v7x TensorCores are used; below
    # that the single-TC no-grid form is faster.

    @jax.jit
    def fwd(x, wx, w2, bias):
        B = x.shape[0]
        assert B <= b_pad, "increase b_pad in pack_params for larger batches"
        x_flat = x.reshape(B, -1).astype(jnp.float32)                 # (B, s_flat)
        x_in = jnp.zeros((b_pad, s_flat), jnp.float32).at[:B].set(x_flat)
        out_pad = call(x_in, wx, w2, bias)                            # (b_pad, cw)
        return out_pad[:B, :action_dim]

    return fwd


# ----------------------------------------------------------------------------- reference (pure JAX, f32)
def actor_forward_ref(x, p, action_dim):
    relu = jax.nn.relu
    B = x.shape[0]

    br = relu(x[:, 0, -1:] @ p["bitrate_w"].T + p["bitrate_b"])
    bf = relu(x[:, 1, -1:] @ p["buffer_w"].T + p["buffer_b"])
    lc = relu(x[:, 5, -1:] @ p["left_w"].T + p["left_b"])

    def conv1d(seq, W, b):                                  # seq (B, S), W (C,1,4)
        L = seq.shape[1] - 3
        cols = jnp.stack([seq[:, l:l + 4] for l in range(L)], axis=1)  # (B, L, 4)
        return jnp.einsum("blk,ck->bcl", cols, W[:, 0, :]) + b[None, :, None]

    t = relu(conv1d(x[:, 2, :], p["tconv_w"], p["tconv_b"]))
    d = relu(conv1d(x[:, 3, :], p["dconv_w"], p["dconv_b"]))
    c = relu(conv1d(x[:, 4, :action_dim], p["cconv_w"], p["cconv_b"]))

    fc_in = jnp.concatenate(
        [br, bf, t.reshape(B, -1), d.reshape(B, -1), c.reshape(B, -1), lc], axis=1)
    fc = relu(fc_in @ p["fc_w"].T + p["fc_b"])
    logits = fc @ p["out_w"].T + p["out_b"]
    return jax.nn.softmax(logits, axis=-1)


# ----------------------------------------------------------------------------- main
if __name__ == "__main__":
    state_dim = (6, 8)      # 6 input channels, history length 8
    action_dim = 6
    n_conv = n_fc = n_fc1 = 128
    B = 2

    key = jax.random.PRNGKey(0)
    kx, kp = jax.random.split(key)
    x = jax.random.normal(kx, (B,) + state_dim, jnp.float32)    # NCL, like PyTorch
    params = make_params(kp, state_dim, action_dim, n_conv, n_fc, n_fc1)

    # one-time packing (block-diagonal fold, fc perm, bf16 casts, bias concat)
    packed, cfg = pack_params(params, state_dim, action_dim, n_conv, n_fc, n_fc1)
    fwd = build_actor_forward(cfg)

    out = fwd(x, packed["wx"], packed["w2"], packed["bias"])
    out = jax.block_until_ready(out)

    ref = actor_forward_ref(x, params, action_dim)
    assert out.shape == (B, action_dim)
    assert bool(jnp.allclose(jnp.sum(out, axis=-1), 1.0, atol=1e-4))
    assert bool(jnp.allclose(out, ref, atol=2e-3, rtol=2e-3))

    print("KERNEL_OK")
</pallas_src>

<mosaic_0001>
module attributes {stable_mosaic.version = 11 : i64} {
  func.func @actor_kernel(%arg0: memref<8x48xf32, #tpu.memory_space<vmem>>, %arg1: memref<48x2048xbf16, #tpu.memory_space<vmem>>, %arg2: memref<2176x128xbf16, #tpu.memory_space<vmem>>, %arg3: memref<1x2304xf32, #tpu.memory_space<vmem>>, %arg4: memref<8x128xf32, #tpu.memory_space<vmem>>) attributes {dimension_semantics = [], scalar_prefetch = 0 : i64, scratch_operands = 0 : i64, tpu.core_type = #tpu.core_type<tc>} {
    %c0 = arith.constant 0 : index
    %c0_0 = arith.constant 0 : index
    %0 = vector.load %arg3[%c0, %c0_0] : memref<1x2304xf32, #tpu.memory_space<vmem>>, vector<1x2048xf32>
    %c0_1 = arith.constant 0 : index
    %c2048 = arith.constant 2048 : index
    %1 = vector.load %arg3[%c0_1, %c2048] : memref<1x2304xf32, #tpu.memory_space<vmem>>, vector<1x128xf32>
    %c0_2 = arith.constant 0 : index
    %c2176 = arith.constant 2176 : index
    %2 = vector.load %arg3[%c0_2, %c2176] : memref<1x2304xf32, #tpu.memory_space<vmem>>, vector<1x128xf32>
    %c0_3 = arith.constant 0 : index
    %c0_4 = arith.constant 0 : index
    %3 = vector.load %arg0[%c0_3, %c0_4] : memref<8x48xf32, #tpu.memory_space<vmem>>, vector<8x48xf32>
    %4 = arith.truncf %3 : vector<8x48xf32> to vector<8x48xbf16>
    %c0_5 = arith.constant 0 : index
    %c0_6 = arith.constant 0 : index
    %5 = vector.load %arg1[%c0_5, %c0_6] : memref<48x2048xbf16, #tpu.memory_space<vmem>>, vector<48x2048xbf16>
    %cst = arith.constant dense<0.000000e+00> : vector<8x2048xf32>
    %6 = tpu.matmul %4, %5, %cst {dimension_numbers = #tpu.dot_dimension_numbers<[1], [0], [0], [1], [0, 0, 1, 1], [], []>} : vector<8x48xbf16>, vector<48x2048xbf16>, vector<8x2048xf32> -> vector<8x2048xf32>
    %7 = vector.broadcast %0 : vector<1x2048xf32> to vector<8x2048xf32>
    %8 = arith.addf %6, %7 : vector<8x2048xf32>
    %cst_7 = arith.constant 0.000000e+00 : f32
    %9 = vector.broadcast %cst_7 : f32 to vector<8x2048xf32>
    %10 = arith.maximumf %8, %9 : vector<8x2048xf32>
    %11 = arith.truncf %10 : vector<8x2048xf32> to vector<8x2048xbf16>
    %c0_8 = arith.constant 0 : index
    %c0_9 = arith.constant 0 : index
    %12 = vector.load %arg2[%c0_8, %c0_9] : memref<2176x128xbf16, #tpu.memory_space<vmem>>, vector<2048x128xbf16>
    %cst_10 = arith.constant dense<0.000000e+00> : vector<8x128xf32>
    %13 = tpu.matmul %11, %12, %cst_10 {dimension_numbers = #tpu.dot_dimension_numbers<[1], [0], [0], [1], [0, 0, 1, 1], [], []>} : vector<8x2048xbf16>, vector<2048x128xbf16>, vector<8x128xf32> -> vector<8x128xf32>
    %14 = vector.broadcast %1 : vector<1x128xf32> to vector<8x128xf32>
    %15 = arith.addf %13, %14 : vector<8x128xf32>
    %cst_11 = arith.constant 0.000000e+00 : f32
    %16 = vector.broadcast %cst_11 : f32 to vector<8x128xf32>
    %17 = arith.maximumf %15, %16 : vector<8x128xf32>
    %18 = arith.truncf %17 : vector<8x128xf32> to vector<8x128xbf16>
    %c2048_12 = arith.constant 2048 : index
    %c0_13 = arith.constant 0 : index
    %19 = vector.load %arg2[%c2048_12, %c0_13] : memref<2176x128xbf16, #tpu.memory_space<vmem>>, vector<128x128xbf16>
    %cst_14 = arith.constant dense<0.000000e+00> : vector<8x128xf32>
    %20 = tpu.matmul %18, %19, %cst_14 {dimension_numbers = #tpu.dot_dimension_numbers<[1], [0], [0], [1], [0, 0, 1, 1], [], []>} : vector<8x128xbf16>, vector<128x128xbf16>, vector<8x128xf32> -> vector<8x128xf32>
    %21 = vector.broadcast %2 : vector<1x128xf32> to vector<8x128xf32>
    %22 = arith.addf %20, %21 : vector<8x128xf32>
    %cst_15 = arith.constant dense<0xFF800000> : vector<8xf32>
    %23 = vector.multi_reduction <maximumf>, %22, %cst_15 [1] : vector<8x128xf32> to vector<8xf32>
    %24 = vector.shape_cast %23 : vector<8xf32> to vector<8x1xf32>
    %25 = vector.broadcast %24 : vector<8x1xf32> to vector<8x128xf32>
    %26 = arith.subf %22, %25 : vector<8x128xf32>
    %27 = math.exp %26 : vector<8x128xf32>
    %cst_16 = arith.constant dense<0.000000e+00> : vector<8xf32>
    %28 = vector.multi_reduction <add>, %27, %cst_16 [1] : vector<8x128xf32> to vector<8xf32>
    %29 = vector.shape_cast %28 : vector<8xf32> to vector<8x1xf32>
    %30 = vector.broadcast %29 : vector<8x1xf32> to vector<8x128xf32>
    %31 = arith.divf %27, %30 : vector<8x128xf32>
    %c0_17 = arith.constant 0 : index
    %c0_18 = arith.constant 0 : index
    %32 = vector.load %arg4[%c0_17, %c0_18] : memref<8x128xf32, #tpu.memory_space<vmem>>, vector<8x128xf32>
    tpu.vector_store %arg4[%c0_17, %c0_18], %31 {strides = array<i32>} : memref<8x128xf32, #tpu.memory_space<vmem>>, vector<8x128xf32>,
    return
  }
}

</mosaic_0001>

<llo_original>
// kernel: fwd.1
$region0: #{fwd.1}
  #allocation0 [shape = 'u32[]', space=smem, size = 0x4, offset = 0x4, fixed_abs, tag = 'smem constant byte address 0x4 - core index']
  #allocation1 [shape = 'u32[144,128]{1,0:T(1,128)}', space=vmem, size = 0x12000, scoped, tag = 'internal scratch']
  %s0 = inlined_call_operand.vmem [shape: f32[8,48], index: 0, kind: input, shape index: {}]
  %s1 = inlined_call_operand.hbm [shape: bf16[48,2048], index: 1, kind: input, shape index: {}]
  %s2 = inlined_call_operand.hbm [shape: bf16[2176,128], index: 2, kind: input, shape index: {}]
  %s3 = inlined_call_operand.vmem [shape: f32[1,2304], index: 3, kind: input, shape index: {}]
  %s4 = inlined_call_operand.vmem [shape: f32[8,128], index: 4, kind: output, shape index: {}]
  %s5 = sld [smem:[#allocation0]]
  $region34: #{fwd.1} parent=0
    _
  %s7 = ssub.s32 1, %s5
  %s8 = scalar_select 0, %s7, %s5
  $region1: #{fwd.1} parent=0
    #allocation2 [shape = 'u8[196608]{0}', space=vmem, size = 0x30000, scoped, tag = 'input window, operand 1, single buffered']
    #allocation3 [shape = 's32[1]{0}', space=sflag, size = 0x4, scoped, tag = 'scoped memory for fwd.1']
    #allocation4 [shape = 'u8[557056]{0}', space=vmem, size = 0x88000, scoped, tag = 'input window, operand 2, single buffered']
    #allocation5 [shape = 's32[1]{0}', space=sflag, size = 0x4, scoped, tag = 'scoped memory for fwd.1']
    %9 = vsyncpa [#allocation3], 0
    %10 = vsyncpa [#allocation5], 0
    // Predicated region
    $region2: #{fwd.1} parent=1 // pred_check
      _
    $region3: #{fwd.1} parent=1 // pred_check_branch
      %12 = sbr.rel (0) target = $region5
    $region4: #{fwd.1} parent=1 // pred_region
      _
    $region5: #{fwd.1} parent=1 // pred_fallthru
      _
    // Predicated region
    $region6: #{fwd.1} parent=1 // pred_check
      _
    $region7: #{fwd.1} parent=1 // pred_check_branch
      %14 = sbr.rel (0) target = $region9
    $region8: #{fwd.1} parent=1 // pred_region
      %s16 = ssub.s32 6144, 6144
      %17 = vsyncadd [#allocation3], %s16
      %s18 = sshll.u32 [#allocation2], 4
      %s19 = int_to_ptr.vmem [resolvable:$true] %s18
      %24 = dma.hbm_to_vmem [thread:$0]  %s1, 6144, %s19, [#allocation3], 1024, 1024, 64
    $region9: #{fwd.1} parent=1 // pred_fallthru
      _
    // Predicated region
    $region10: #{fwd.1} parent=1 // pred_check
      _
    $region11: #{fwd.1} parent=1 // pred_check_branch
      %26 = sbr.rel (0) target = $region13
    $region12: #{fwd.1} parent=1 // pred_region
      %s28 = ssub.s32 17408, 17408
      %29 = vsyncadd [#allocation5], %s28
      %s30 = sshll.u32 [#allocation4], 4
      %s31 = int_to_ptr.vmem [resolvable:$true] %s30
      %36 = dma.hbm_to_vmem [thread:$0]  %s2, 17408, %s31, [#allocation5], 64, 64, 4
    $region13: #{fwd.1} parent=1 // pred_fallthru
      _
    // Predicated region
    $region14: #{fwd.1} parent=1 // pred_check
      _
    $region15: #{fwd.1} parent=1 // pred_check_branch
      %38 = sbr.rel (0) target = $region17
    $region16: #{fwd.1} parent=1 // pred_region
      _
    $region17: #{fwd.1} parent=1 // pred_fallthru
      _
    // Predicated region
    $region18: #{fwd.1} parent=1 // pred_check
      _
    $region19: #{fwd.1} parent=1 // pred_check_branch
      %40 = sbr.rel (0) target = $region21
    $region20: #{fwd.1} parent=1 // pred_region
      %41 = dma.done [#allocation3], 6144
    $region21: #{fwd.1} parent=1 // pred_fallthru
      _
    // Predicated region
    $region22: #{fwd.1} parent=1 // pred_check
      _
    $region23: #{fwd.1} parent=1 // pred_check_branch
      %43 = sbr.rel (0) target = $region25
    $region24: #{fwd.1} parent=1 // pred_region
      %44 = dma.done [#allocation5], 17408
    $region25: #{fwd.1} parent=1 // pred_fallthru
      _
    %v46 = vld [vmem:[%s3] sm:$0xff]
    %v47 = vld [vmem:[%s3 + $0x8] sm:$0xff]
    %v48 = vld [vmem:[%s3 + $0x10] sm:$0x1]
    %v49 = vld [vmem:[%s3 + $0x11] sm:$0x1]
    %v50 = vld [vmem:[%s0] sm:$0xff]
    %v51 = vpack.c.bf16 %v50, %v50
    %v52 = vld [vmem:[#allocation2] sm:$0xff]
    %v53 = vld [vmem:[#allocation2 + $0x8] sm:$0xff]
    %v54 = vld [vmem:[#allocation2 + $0x10] sm:$0xff]
    %v55 = vld [vmem:[#allocation2 + $0x18] sm:$0xff]
    %v56 = vld [vmem:[#allocation2 + $0x20] sm:$0xff]
    %v57 = vld [vmem:[#allocation2 + $0x28] sm:$0xff]
    %v58 = vld [vmem:[#allocation2 + $0x30] sm:$0xff]
    %v59 = vld [vmem:[#allocation2 + $0x38] sm:$0xff]
    %v60 = vld [vmem:[#allocation2 + $0x40] sm:$0xff]
    %v61 = vld [vmem:[#allocation2 + $0x48] sm:$0xff]
    %v62 = vld [vmem:[#allocation2 + $0x50] sm:$0xff]
    %v63 = vld [vmem:[#allocation2 + $0x58] sm:$0xff]
    %v64 = vld [vmem:[#allocation2 + $0x60] sm:$0xff]
    %v65 = vld [vmem:[#allocation2 + $0x68] sm:$0xff]
    %v66 = vld [vmem:[#allocation2 + $0x70] sm:$0xff]
    %v67 = vld [vmem:[#allocation2 + $0x78] sm:$0xff]
    %v68 = vld [vmem:[#allocation2 + $0x80] sm:$0xff]
    %v69 = vld [vmem:[#allocation2 + $0x88] sm:$0xff]
    %v70 = vld [vmem:[#allocation2 + $0x90] sm:$0xff]
    %v71 = vld [vmem:[#allocation2 + $0x98] sm:$0xff]
    %v72 = vld [vmem:[#allocation2 + $0xa0] sm:$0xff]
    %v73 = vld [vmem:[#allocation2 + $0xa8] sm:$0xff]
    %v74 = vld [vmem:[#allocation2 + $0xb0] sm:$0xff]
    %v75 = vld [vmem:[#allocation2 + $0xb8] sm:$0xff]
    %v76 = vld [vmem:[#allocation2 + $0xc0] sm:$0xff]
    %v77 = vld [vmem:[#allocation2 + $0xc8] sm:$0xff]
    %v78 = vld [vmem:[#allocation2 + $0xd0] sm:$0xff]
    %v79 = vld [vmem:[#allocation2 + $0xd8] sm:$0xff]
    %v80 = vld [vmem:[#allocation2 + $0xe0] sm:$0xff]
    %v81 = vld [vmem:[#allocation2 + $0xe8] sm:$0xff]
    %v82 = vld [vmem:[#allocation2 + $0xf0] sm:$0xff]
    %v83 = vld [vmem:[#allocation2 + $0xf8] sm:$0xff]
    %v84 = vld [vmem:[#allocation2 + $0x100] sm:$0xff]
    %v85 = vld [vmem:[#allocation2 + $0x108] sm:$0xff]
    %v86 = vld [vmem:[#allocation2 + $0x110] sm:$0xff]
    %v87 = vld [vmem:[#allocation2 + $0x118] sm:$0xff]
    %v88 = vld [vmem:[#allocation2 + $0x120] sm:$0xff]
    %v89 = vld [vmem:[#allocation2 + $0x128] sm:$0xff]
    %v90 = vld [vmem:[#allocation2 + $0x130] sm:$0xff]
    %v91 = vld [vmem:[#allocation2 + $0x138] sm:$0xff]
    %v92 = vld [vmem:[#allocation2 + $0x140] sm:$0xff]
    %v93 = vld [vmem:[#allocation2 + $0x148] sm:$0xff]
    %v94 = vld [vmem:[#allocation2 + $0x150] sm:$0xff]
    %v95 = vld [vmem:[#allocation2 + $0x158] sm:$0xff]
    %v96 = vld [vmem:[#allocation2 + $0x160] sm:$0xff]
    %v97 = vld [vmem:[#allocation2 + $0x168] sm:$0xff]
    %v98 = vld [vmem:[#allocation2 + $0x170] sm:$0xff]
    %v99 = vld [vmem:[#allocation2 + $0x178] sm:$0xff]
    %v102 = vlaneseq
    %v103 = vshrl.u32 %v102, 7
    %v104 = vsub.s32 0, %v103
    %v105 = vrot.slane %v46, %v104
    %v106 = vlaneseq
    %v107 = vshrl.u32 %v106, 7
    %v108 = vsub.s32 1, %v107
    %v109 = vrot.slane %v46, %v108
    %v110 = vlaneseq
    %v111 = vshrl.u32 %v110, 7
    %v112 = vsub.s32 2, %v111
    %v113 = vrot.slane %v46, %v112
    %v114 = vlaneseq
    %v115 = vshrl.u32 %v114, 7
    %v116 = vsub.s32 3, %v115
    %v117 = vrot.slane %v46, %v116
    %v118 = vlaneseq
    %v119 = vshrl.u32 %v118, 7
    %v120 = vsub.s32 4, %v119
    %v121 = vrot.slane %v46, %v120
    %v122 = vlaneseq
    %v123 = vshrl.u32 %v122, 7
    %v124 = vsub.s32 5, %v123
    %v125 = vrot.slane %v46, %v124
    %v126 = vlaneseq
    %v127 = vshrl.u32 %v126, 7
    %v128 = vsub.s32 6, %v127
    %v129 = vrot.slane %v46, %v128
    %v130 = vlaneseq
    %v131 = vshrl.u32 %v130, 7
    %v132 = vsub.s32 7, %v131
    %v133 = vrot.slane %v46, %v132
    %v134 = vlaneseq
    %v135 = vshrl.u32 %v134, 7
    %v136 = vsub.s32 0, %v135
    %v137 = vrot.slane %v47, %v136
    %v138 = vlaneseq
    %v139 = vshrl.u32 %v138, 7
    %v140 = vsub.s32 1, %v139
    %v141 = vrot.slane %v47, %v140
    %v142 = vlaneseq
    %v143 = vshrl.u32 %v142, 7
    %v144 = vsub.s32 2, %v143
    %v145 = vrot.slane %v47, %v144
    %v146 = vlaneseq
    %v147 = vshrl.u32 %v146, 7
    %v148 = vsub.s32 3, %v147
    %v149 = vrot.slane %v47, %v148
    %v150 = vlaneseq
    %v151 = vshrl.u32 %v150, 7
    %v152 = vsub.s32 4, %v151
    %v153 = vrot.slane %v47, %v152
    %v154 = vlaneseq
    %v155 = vshrl.u32 %v154, 7
    %v156 = vsub.s32 5, %v155
    %v157 = vrot.slane %v47, %v156
    %v158 = vlaneseq
    %v159 = vshrl.u32 %v158, 7
    %v160 = vsub.s32 6, %v159
    %v161 = vrot.slane %v47, %v160
    %v162 = vlaneseq
    %v163 = vshrl.u32 %v162, 7
    %v164 = vsub.s32 7, %v163
    %v165 = vrot.slane %v47, %v164
    %v230 = vunpack.c.l.b16 %v52
    %v231 = vunpack.c.h.b16 %v52
    %v232 = vunpack.c.l.b16 %v53
    %v233 = vunpack.c.h.b16 %v53
    %v234 = vunpack.c.l.b16 %v54
    %v235 = vunpack.c.h.b16 %v54
    %v236 = vunpack.c.l.b16 %v55
    %v237 = vunpack.c.h.b16 %v55
    %v238 = vunpack.c.l.b16 %v56
    %v239 = vunpack.c.h.b16 %v56
    %v240 = vunpack.c.l.b16 %v57
    %v241 = vunpack.c.h.b16 %v57
    %v242 = vunpack.c.l.b16 %v58
    %v243 = vunpack.c.h.b16 %v58
    %v244 = vunpack.c.l.b16 %v59
    %v245 = vunpack.c.h.b16 %v59
    %v246 = vunpack.c.l.b16 %v60
    %v247 = vunpack.c.h.b16 %v60
    %v248 = vunpack.c.l.b16 %v61
    %v249 = vunpack.c.h.b16 %v61
    %v250 = vunpack.c.l.b16 %v62
    %v251 = vunpack.c.h.b16 %v62
    %v252 = vunpack.c.l.b16 %v63
    %v253 = vunpack.c.h.b16 %v63
    %v254 = vunpack.c.l.b16 %v64
    %v255 = vunpack.c.h.b16 %v64
    %v256 = vunpack.c.l.b16 %v65
    %v257 = vunpack.c.h.b16 %v65
    %v258 = vunpack.c.l.b16 %v66
    %v259 = vunpack.c.h.b16 %v66
    %v260 = vunpack.c.l.b16 %v67
    %v261 = vunpack.c.h.b16 %v67
    %v262 = vunpack.c.l.b16 %v68
    %v263 = vunpack.c.h.b16 %v68
    %v264 = vunpack.c.l.b16 %v69
    %v265 = vunpack.c.h.b16 %v69
    %v266 = vunpack.c.l.b16 %v70
    %v267 = vunpack.c.h.b16 %v70
    %v268 = vunpack.c.l.b16 %v71
    %v269 = vunpack.c.h.b16 %v71
    %v270 = vunpack.c.l.b16 %v72
    %v271 = vunpack.c.h.b16 %v72
    %v272 = vunpack.c.l.b16 %v73
    %v273 = vunpack.c.h.b16 %v73
    %v274 = vunpack.c.l.b16 %v74
    %v275 = vunpack.c.h.b16 %v74
    %v276 = vunpack.c.l.b16 %v75
    %v277 = vunpack.c.h.b16 %v75
    %v278 = vunpack.c.l.b16 %v76
    %v279 = vunpack.c.h.b16 %v76
    %v280 = vunpack.c.l.b16 %v77
    %v281 = vunpack.c.h.b16 %v77
    %v282 = vunpack.c.l.b16 %v78
    %v283 = vunpack.c.h.b16 %v78
    %v284 = vunpack.c.l.b16 %v79
    %v285 = vunpack.c.h.b16 %v79
    %v286 = vunpack.c.l.b16 %v80
    %v287 = vunpack.c.h.b16 %v80
    %v288 = vunpack.c.l.b16 %v81
    %v289 = vunpack.c.h.b16 %v81
    %v290 = vunpack.c.l.b16 %v82
    %v291 = vunpack.c.h.b16 %v82
    %v292 = vunpack.c.l.b16 %v83
    %v293 = vunpack.c.h.b16 %v83
    %v294 = vunpack.c.l.b16 %v84
    %v295 = vunpack.c.h.b16 %v84
    %v296 = vunpack.c.l.b16 %v85
    %v297 = vunpack.c.h.b16 %v85
    %v298 = vunpack.c.l.b16 %v86
    %v299 = vunpack.c.h.b16 %v86
    %v300 = vunpack.c.l.b16 %v87
    %v301 = vunpack.c.h.b16 %v87
    %v302 = vunpack.c.l.b16 %v88
    %v303 = vunpack.c.h.b16 %v88
    %v304 = vunpack.c.l.b16 %v89
    %v305 = vunpack.c.h.b16 %v89
    %v306 = vunpack.c.l.b16 %v90
    %v307 = vunpack.c.h.b16 %v90
    %v308 = vunpack.c.l.b16 %v91
    %v309 = vunpack.c.h.b16 %v91
    %v310 = vunpack.c.l.b16 %v92
    %v311 = vunpack.c.h.b16 %v92
    %v312 = vunpack.c.l.b16 %v93
    %v313 = vunpack.c.h.b16 %v93
    %v314 = vunpack.c.l.b16 %v94
    %v315 = vunpack.c.h.b16 %v94
    %v316 = vunpack.c.l.b16 %v95
    %v317 = vunpack.c.h.b16 %v95
    %v318 = vunpack.c.l.b16 %v96
    %v319 = vunpack.c.h.b16 %v96
    %v320 = vunpack.c.l.b16 %v97
    %v321 = vunpack.c.h.b16 %v97
    %v322 = vunpack.c.l.b16 %v98
    %v323 = vunpack.c.h.b16 %v98
    %v324 = vunpack.c.l.b16 %v99
    %v325 = vunpack.c.h.b16 %v99
    %v326 = vpack.c.b16 %v246, %v230
    %v327 = vpack.c.b16 %v247, %v231
    %v328 = vpack.c.b16 %v248, %v232
    %v329 = vpack.c.b16 %v249, %v233
    %v330 = vpack.c.b16 %v250, %v234
    %v331 = vpack.c.b16 %v251, %v235
    %v332 = vpack.c.b16 %v252, %v236
    %v333 = vpack.c.b16 %v253, %v237
    %v334 = vpack.c.b16 %v254, %v238
    %v335 = vpack.c.b16 %v255, %v239
    %v336 = vpack.c.b16 %v256, %v240
    %v337 = vpack.c.b16 %v257, %v241
    %v338 = vpack.c.b16 %v258, %v242
    %v339 = vpack.c.b16 %v259, %v243
    %v340 = vpack.c.b16 %v260, %v244
    %v341 = vpack.c.b16 %v261, %v245
    %v342 = vpack.c.b16 %v278, %v262
    %v343 = vpack.c.b16 %v279, %v263
    %v344 = vpack.c.b16 %v280, %v264
    %v345 = vpack.c.b16 %v281, %v265
    %v346 = vpack.c.b16 %v282, %v266
    %v347 = vpack.c.b16 %v283, %v267
    %v348 = vpack.c.b16 %v284, %v268
    %v349 = vpack.c.b16 %v285, %v269
    %v350 = vpack.c.b16 %v286, %v270
    %v351 = vpack.c.b16 %v287, %v271
    %v352 = vpack.c.b16 %v288, %v272
    %v353 = vpack.c.b16 %v289, %v273
    %v354 = vpack.c.b16 %v290, %v274
    %v355 = vpack.c.b16 %v291, %v275
    %v356 = vpack.c.b16 %v292, %v276
    %v357 = vpack.c.b16 %v293, %v277
    %v358 = vpack.c.b16 %v310, %v294
    %v359 = vpack.c.b16 %v311, %v295
    %v360 = vpack.c.b16 %v312, %v296
    %v361 = vpack.c.b16 %v313, %v297
    %v362 = vpack.c.b16 %v314, %v298
    %v363 = vpack.c.b16 %v315, %v299
    %v364 = vpack.c.b16 %v316, %v300
    %v365 = vpack.c.b16 %v317, %v301
    %v366 = vpack.c.b16 %v318, %v302
    %v367 = vpack.c.b16 %v319, %v303
    %v368 = vpack.c.b16 %v320, %v304
    %v369 = vpack.c.b16 %v321, %v305
    %v370 = vpack.c.b16 %v322, %v306
    %v371 = vpack.c.b16 %v323, %v307
    %v372 = vpack.c.b16 %v324, %v308
    %v373 = vpack.c.b16 %v325, %v309
    %vm422 = vcmask 392192
    %v424 = vsel %vm422, %v51, 0
    %426 = vmatprep.subr.bf16.mxu0 %v327
    %427 = vmatpush1.bf16.msra.mxu0 %v326
    %428 = vmatprep.subr.bf16.mxu0 %v343
    %429 = vmatpush1.bf16.msra.mxu0 %v342
    %430 = vmatprep.subr.bf16.mxu0 %v359
    %431 = vmatpush1.bf16.msra.mxu0 %v358
    %432 = vmatprep.subr.bf16.mxu0 0
    %433 = vmatpush1.bf16.msra.mxu0 0
    %434 = vmatprep.subr.bf16.mxu0 0
    %435 = vmatpush1.bf16.msra.mxu0 0
    %436 = vmatprep.subr.bf16.mxu0 0
    %437 = vmatpush1.bf16.msra.mxu0 0
    %438 = vmatprep.subr.bf16.mxu0 0
    %439 = vmatpush1.bf16.msra.mxu0 0
    %440 = vmatprep.subr.bf16.mxu0 0
    %441 = vmatpush1.bf16.msra.mxu0 0
    %442 = vmatprep.subr.bf16.mxu0 0
    %443 = vmatpush1.bf16.msra.mxu0 0
    %444 = vmatprep.subr.bf16.mxu0 0
    %445 = vmatpush1.bf16.msra.mxu0 0
    %446 = vmatprep.subr.bf16.mxu0 0
    %447 = vmatpush1.bf16.msra.mxu0 0
    %448 = vmatprep.subr.bf16.mxu0 0
    %449 = vmatpush1.bf16.msra.mxu0 0
    %450 = vmatprep.subr.bf16.mxu0 0
    %451 = vmatpush1.bf16.msra.mxu0 0
    %452 = vmatprep.subr.bf16.mxu0 0
    %453 = vmatpush1.bf16.msra.mxu0 0
    %454 = vmatprep.subr.bf16.mxu0 0
    %455 = vmatpush1.bf16.msra.mxu0 0
    %456 = vmatprep.subr.bf16.mxu0 0
    %457 = vmatpush1.bf16.msra.mxu0 0
    %458 = vmatprep.mubr.bf16.mxu0 0
    %459 = vmatmul.mubr.bf16.gmra.mrb[0].mxu0 %v424
    %v460 = vpop.f32.mrb[0].mxu0
    %v461 = vadd.f32 %v105, %v460
    %v462 = vpop.f32.mrb[0].mxu0
    %v463 = vadd.f32 %v109, %v462
    %v464 = vpop.f32.mrb[0].mxu0
    %v465 = vpop.f32.mrb[0].mxu0
    %466 = vdwg.mxu0
    %467 = vmatprep.subr.bf16.mxu0 %v329
    %468 = vmatpush1.bf16.msra.mxu0 %v328
    %469 = vmatprep.subr.bf16.mxu0 %v345
    %470 = vmatpush1.bf16.msra.mxu0 %v344
    %471 = vmatprep.subr.bf16.mxu0 %v361
    %472 = vmatpush1.bf16.msra.mxu0 %v360
    %473 = vmatprep.subr.bf16.mxu0 0
    %474 = vmatpush1.bf16.msra.mxu0 0
    %475 = vmatprep.subr.bf16.mxu0 0
    %476 = vmatpush1.bf16.msra.mxu0 0
    %477 = vmatprep.subr.bf16.mxu0 0
    %478 = vmatpush1.bf16.msra.mxu0 0
    %479 = vmatprep.subr.bf16.mxu0 0
    %480 = vmatpush1.bf16.msra.mxu0 0
    %481 = vmatprep.subr.bf16.mxu0 0
    %482 = vmatpush1.bf16.msra.mxu0 0
    %483 = vmatprep.subr.bf16.mxu0 0
    %484 = vmatpush1.bf16.msra.mxu0 0
    %485 = vmatprep.subr.bf16.mxu0 0
    %486 = vmatpush1.bf16.msra.mxu0 0
    %487 = vmatprep.subr.bf16.mxu0 0
    %488 = vmatpush1.bf16.msra.mxu0 0
    %489 = vmatprep.subr.bf16.mxu0 0
    %490 = vmatpush1.bf16.msra.mxu0 0
    %491 = vmatprep.subr.bf16.mxu0 0
    %492 = vmatpush1.bf16.msra.mxu0 0
    %493 = vmatprep.subr.bf16.mxu0 0
    %494 = vmatpush1.bf16.msra.mxu0 0
    %495 = vmatprep.subr.bf16.mxu0 0
    %496 = vmatpush1.bf16.msra.mxu0 0
    %497 = vmatprep.subr.bf16.mxu0 0
    %498 = vmatpush1.bf16.msra.mxu0 0
    %499 = vmatprep.mubr.bf16.mxu0 0
    %500 = vmatmul.mubr.bf16.gmra.mrb[0].mxu0 %v424
    %v501 = vpop.f32.mrb[0].mxu0
    %v502 = vadd.f32 %v113, %v501
    %v503 = vpop.f32.mrb[0].mxu0
    %v504 = vadd.f32 %v117, %v503
    %v505 = vpop.f32.mrb[0].mxu0
    %v506 = vpop.f32.mrb[0].mxu0
    %507 = vdwg.mxu0
    %508 = vmatprep.subr.bf16.mxu0 %v331
    %509 = vmatpush1.bf16.msra.mxu0 %v330
    %510 = vmatprep.subr.bf16.mxu0 %v347
    %511 = vmatpush1.bf16.msra.mxu0 %v346
    %512 = vmatprep.subr.bf16.mxu0 %v363
    %513 = vmatpush1.bf16.msra.mxu0 %v362
    %514 = vmatprep.subr.bf16.mxu0 0
    %515 = vmatpush1.bf16.msra.mxu0 0
    %516 = vmatprep.subr.bf16.mxu0 0
    %517 = vmatpush1.bf16.msra.mxu0 0
    %518 = vmatprep.subr.bf16.mxu0 0
    %519 = vmatpush1.bf16.msra.mxu0 0
    %520 = vmatprep.subr.bf16.mxu0 0
    %521 = vmatpush1.bf16.msra.mxu0 0
    %522 = vmatprep.subr.bf16.mxu0 0
    %523 = vmatpush1.bf16.msra.mxu0 0
    %524 = vmatprep.subr.bf16.mxu0 0
    %525 = vmatpush1.bf16.msra.mxu0 0
    %526 = vmatprep.subr.bf16.mxu0 0
    %527 = vmatpush1.bf16.msra.mxu0 0
    %528 = vmatprep.subr.bf16.mxu0 0
    %529 = vmatpush1.bf16.msra.mxu0 0
    %530 = vmatprep.subr.bf16.mxu0 0
    %531 = vmatpush1.bf16.msra.mxu0 0
    %532 = vmatprep.subr.bf16.mxu0 0
    %533 = vmatpush1.bf16.msra.mxu0 0
    %534 = vmatprep.subr.bf16.mxu0 0
    %535 = vmatpush1.bf16.msra.mxu0 0
    %536 = vmatprep.subr.bf16.mxu0 0
    %537 = vmatpush1.bf16.msra.mxu0 0
    %538 = vmatprep.subr.bf16.mxu0 0
    %539 = vmatpush1.bf16.msra.mxu0 0
    %540 = vmatprep.mubr.bf16.mxu0 0
    %541 = vmatmul.mubr.bf16.gmra.mrb[0].mxu0 %v424
    %v542 = vpop.f32.mrb[0].mxu0
    %v543 = vadd.f32 %v121, %v542
    %v544 = vpop.f32.mrb[0].mxu0
    %v545 = vadd.f32 %v125, %v544
    %v546 = vpop.f32.mrb[0].mxu0
    %v547 = vpop.f32.mrb[0].mxu0
    %548 = vdwg.mxu0
    %549 = vmatprep.subr.bf16.mxu0 %v333
    %550 = vmatpush1.bf16.msra.mxu0 %v332
    %551 = vmatprep.subr.bf16.mxu0 %v349
    %552 = vmatpush1.bf16.msra.mxu0 %v348
    %553 = vmatprep.subr.bf16.mxu0 %v365
    %554 = vmatpush1.bf16.msra.mxu0 %v364
    %555 = vmatprep.subr.bf16.mxu0 0
    %556 = vmatpush1.bf16.msra.mxu0 0
    %557 = vmatprep.subr.bf16.mxu0 0
    %558 = vmatpush1.bf16.msra.mxu0 0
    %559 = vmatprep.subr.bf16.mxu0 0
    %560 = vmatpush1.bf16.msra.mxu0 0
    %561 = vmatprep.subr.bf16.mxu0 0
    %562 = vmatpush1.bf16.msra.mxu0 0
    %563 = vmatprep.subr.bf16.mxu0 0
    %564 = vmatpush1.bf16.msra.mxu0 0
    %565 = vmatprep.subr.bf16.mxu0 0
    %566 = vmatpush1.bf16.msra.mxu0 0
    %567 = vmatprep.subr.bf16.mxu0 0
    %568 = vmatpush1.bf16.msra.mxu0 0
    %569 = vmatprep.subr.bf16.mxu0 0
    %570 = vmatpush1.bf16.msra.mxu0 0
    %571 = vmatprep.subr.bf16.mxu0 0
    %572 = vmatpush1.bf16.msra.mxu0 0
    %573 = vmatprep.subr.bf16.mxu0 0
    %574 = vmatpush1.bf16.msra.mxu0 0
    %575 = vmatprep.subr.bf16.mxu0 0
    %576 = vmatpush1.bf16.msra.mxu0 0
    %577 = vmatprep.subr.bf16.mxu0 0
    %578 = vmatpush1.bf16.msra.mxu0 0
    %579 = vmatprep.subr.bf16.mxu0 0
    %580 = vmatpush1.bf16.msra.mxu0 0
    %581 = vmatprep.mubr.bf16.mxu0 0
    %582 = vmatmul.mubr.bf16.gmra.mrb[0].mxu0 %v424
    %v583 = vpop.f32.mrb[0].mxu0
    %v584 = vadd.f32 %v129, %v583
    %v585 = vpop.f32.mrb[0].mxu0
    %v586 = vadd.f32 %v133, %v585
    %v587 = vpop.f32.mrb[0].mxu0
    %v588 = vpop.f32.mrb[0].mxu0
    %589 = vdwg.mxu0
    %590 = vmatprep.subr.bf16.mxu0 %v335
    %591 = vmatpush1.bf16.msra.mxu0 %v334
    %592 = vmatprep.subr.bf16.mxu0 %v351
    %593 = vmatpush1.bf16.msra.mxu0 %v350
    %594 = vmatprep.subr.bf16.mxu0 %v367
    %595 = vmatpush1.bf16.msra.mxu0 %v366
    %596 = vmatprep.subr.bf16.mxu0 0
    %597 = vmatpush1.bf16.msra.mxu0 0
    %598 = vmatprep.subr.bf16.mxu0 0
    %599 = vmatpush1.bf16.msra.mxu0 0
    %600 = vmatprep.subr.bf16.mxu0 0
    %601 = vmatpush1.bf16.msra.mxu0 0
    %602 = vmatprep.subr.bf16.mxu0 0
    %603 = vmatpush1.bf16.msra.mxu0 0
    %604 = vmatprep.subr.bf16.mxu0 0
    %605 = vmatpush1.bf16.msra.mxu0 0
    %606 = vmatprep.subr.bf16.mxu0 0
    %607 = vmatpush1.bf16.msra.mxu0 0
    %608 = vmatprep.subr.bf16.mxu0 0
    %609 = vmatpush1.bf16.msra.mxu0 0
    %610 = vmatprep.subr.bf16.mxu0 0
    %611 = vmatpush1.bf16.msra.mxu0 0
    %612 = vmatprep.subr.bf16.mxu0 0
    %613 = vmatpush1.bf16.msra.mxu0 0
    %614 = vmatprep.subr.bf16.mxu0 0
    %615 = vmatpush1.bf16.msra.mxu0 0
    %616 = vmatprep.subr.bf16.mxu0 0
    %617 = vmatpush1.bf16.msra.mxu0 0
    %618 = vmatprep.subr.bf16.mxu0 0
    %619 = vmatpush1.bf16.msra.mxu0 0
    %620 = vmatprep.subr.bf16.mxu0 0
    %621 = vmatpush1.bf16.msra.mxu0 0
    %622 = vmatprep.mubr.bf16.mxu0 0
    %623 = vmatmul.mubr.bf16.gmra.mrb[0].mxu0 %v424
    %v624 = vpop.f32.mrb[0].mxu0
    %v625 = vadd.f32 %v137, %v624
    %v626 = vpop.f32.mrb[0].mxu0
    %v627 = vadd.f32 %v141, %v626
    %v628 = vpop.f32.mrb[0].mxu0
    %v629 = vpop.f32.mrb[0].mxu0
    %630 = vdwg.mxu0
    %631 = vmatprep.subr.bf16.mxu0 %v337
    %632 = vmatpush1.bf16.msra.mxu0 %v336
    %633 = vmatprep.subr.bf16.mxu0 %v353
    %634 = vmatpush1.bf16.msra.mxu0 %v352
    %635 = vmatprep.subr.bf16.mxu0 %v369
    %636 = vmatpush1.bf16.msra.mxu0 %v368
    %637 = vmatprep.subr.bf16.mxu0 0
    %638 = vmatpush1.bf16.msra.mxu0 0
    %639 = vmatprep.subr.bf16.mxu0 0
    %640 = vmatpush1.bf16.msra.mxu0 0
    %641 = vmatprep.subr.bf16.mxu0 0
    %642 = vmatpush1.bf16.msra.mxu0 0
    %643 = vmatprep.subr.bf16.mxu0 0
    %644 = vmatpush1.bf16.msra.mxu0 0
    %645 = vmatprep.subr.bf16.mxu0 0
    %646 = vmatpush1.bf16.msra.mxu0 0
    %647 = vmatprep.subr.bf16.mxu0 0
    %648 = vmatpush1.bf16.msra.mxu0 0
    %649 = vmatprep.subr.bf16.mxu0 0
    %650 = vmatpush1.bf16.msra.mxu0 0
    %651 = vmatprep.subr.bf16.mxu0 0
    %652 = vmatpush1.bf16.msra.mxu0 0
    %653 = vmatprep.subr.bf16.mxu0 0
    %654 = vmatpush1.bf16.msra.mxu0 0
    %655 = vmatprep.subr.bf16.mxu0 0
    %656 = vmatpush1.bf16.msra.mxu0 0
    %657 = vmatprep.subr.bf16.mxu0 0
    %658 = vmatpush1.bf16.msra.mxu0 0
    %659 = vmatprep.subr.bf16.mxu0 0
    %660 = vmatpush1.bf16.msra.mxu0 0
    %661 = vmatprep.subr.bf16.mxu0 0
    %662 = vmatpush1.bf16.msra.mxu0 0
    %663 = vmatprep.mubr.bf16.mxu0 0
    %664 = vmatmul.mubr.bf16.gmra.mrb[0].mxu0 %v424
    %v665 = vpop.f32.mrb[0].mxu0
    %v666 = vadd.f32 %v145, %v665
    %v667 = vpop.f32.mrb[0].mxu0
    %v668 = vadd.f32 %v149, %v667
    %v669 = vpop.f32.mrb[0].mxu0
    %v670 = vpop.f32.mrb[0].mxu0
    %671 = vdwg.mxu0
    %672 = vmatprep.subr.bf16.mxu0 %v339
    %673 = vmatpush1.bf16.msra.mxu0 %v338
    %674 = vmatprep.subr.bf16.mxu0 %v355
    %675 = vmatpush1.bf16.msra.mxu0 %v354
    %676 = vmatprep.subr.bf16.mxu0 %v371
    %677 = vmatpush1.bf16.msra.mxu0 %v370
    %678 = vmatprep.subr.bf16.mxu0 0
    %679 = vmatpush1.bf16.msra.mxu0 0
    %680 = vmatprep.subr.bf16.mxu0 0
    %681 = vmatpush1.bf16.msra.mxu0 0
    %682 = vmatprep.subr.bf16.mxu0 0
    %683 = vmatpush1.bf16.msra.mxu0 0
    %684 = vmatprep.subr.bf16.mxu0 0
    %685 = vmatpush1.bf16.msra.mxu0 0
    %686 = vmatprep.subr.bf16.mxu0 0
    %687 = vmatpush1.bf16.msra.mxu0 0
    %688 = vmatprep.subr.bf16.mxu0 0
    %689 = vmatpush1.bf16.msra.mxu0 0
    %690 = vmatprep.subr.bf16.mxu0 0
    %691 = vmatpush1.bf16.msra.mxu0 0
    %692 = vmatprep.subr.bf16.mxu0 0
    %693 = vmatpush1.bf16.msra.mxu0 0
    %694 = vmatprep.subr.bf16.mxu0 0
    %695 = vmatpush1.bf16.msra.mxu0 0
    %696 = vmatprep.subr.bf16.mxu0 0
    %697 = vmatpush1.bf16.msra.mxu0 0
    %698 = vmatprep.subr.bf16.mxu0 0
    %699 = vmatpush1.bf16.msra.mxu0 0
    %700 = vmatprep.subr.bf16.mxu0 0
    %701 = vmatpush1.bf16.msra.mxu0 0
    %702 = vmatprep.subr.bf16.mxu0 0
    %703 = vmatpush1.bf16.msra.mxu0 0
    %704 = vmatprep.mubr.bf16.mxu0 0
    %705 = vmatmul.mubr.bf16.gmra.mrb[0].mxu0 %v424
    %v706 = vpop.f32.mrb[0].mxu0
    %v707 = vadd.f32 %v153, %v706
    %v708 = vpop.f32.mrb[0].mxu0
    %v709 = vadd.f32 %v157, %v708
    %v710 = vpop.f32.mrb[0].mxu0
    %v711 = vpop.f32.mrb[0].mxu0
    %712 = vdwg.mxu0
    %713 = vmatprep.subr.bf16.mxu0 %v341
    %714 = vmatpush1.bf16.msra.mxu0 %v340
    %715 = vmatprep.subr.bf16.mxu0 %v357
    %716 = vmatpush1.bf16.msra.mxu0 %v356
    %717 = vmatprep.subr.bf16.mxu0 %v373
    %718 = vmatpush1.bf16.msra.mxu0 %v372
    %719 = vmatprep.subr.bf16.mxu0 0
    %720 = vmatpush1.bf16.msra.mxu0 0
    %721 = vmatprep.subr.bf16.mxu0 0
    %722 = vmatpush1.bf16.msra.mxu0 0
    %723 = vmatprep.subr.bf16.mxu0 0
    %724 = vmatpush1.bf16.msra.mxu0 0
    %725 = vmatprep.subr.bf16.mxu0 0
    %726 = vmatpush1.bf16.msra.mxu0 0
    %727 = vmatprep.subr.bf16.mxu0 0
    %728 = vmatpush1.bf16.msra.mxu0 0
    %729 = vmatprep.subr.bf16.mxu0 0
    %730 = vmatpush1.bf16.msra.mxu0 0
    %731 = vmatprep.subr.bf16.mxu0 0
    %732 = vmatpush1.bf16.msra.mxu0 0
    %733 = vmatprep.subr.bf16.mxu0 0
    %734 = vmatpush1.bf16.msra.mxu0 0
    %735 = vmatprep.subr.bf16.mxu0 0
    %736 = vmatpush1.bf16.msra.mxu0 0
    %737 = vmatprep.subr.bf16.mxu0 0
    %738 = vmatpush1.bf16.msra.mxu0 0
    %739 = vmatprep.subr.bf16.mxu0 0
    %740 = vmatpush1.bf16.msra.mxu0 0
    %741 = vmatprep.subr.bf16.mxu0 0
    %742 = vmatpush1.bf16.msra.mxu0 0
    %743 = vmatprep.subr.bf16.mxu0 0
    %744 = vmatpush1.bf16.msra.mxu0 0
    %745 = vmatprep.mubr.bf16.mxu0 0
    %746 = vmatmul.mubr.bf16.gmra.mrb[0].mxu0 %v424
    %v747 = vpop.f32.mrb[0].mxu0
    %v748 = vadd.f32 %v161, %v747
    %v749 = vpop.f32.mrb[0].mxu0
    %v750 = vadd.f32 %v165, %v749
    %v751 = vpop.f32.mrb[0].mxu0
    %v752 = vpop.f32.mrb[0].mxu0
    %753 = vdwg.mxu0
    %v754 = vmax.f32 %v461, 0.0
    %v755 = vmax.f32 %v463, 0.0
    %v756 = vmax.f32 %v502, 0.0
    %v757 = vmax.f32 %v504, 0.0
    %v758 = vmax.f32 %v543, 0.0
    %v759 = vmax.f32 %v545, 0.0
    %v760 = vmax.f32 %v584, 0.0
    %v761 = vmax.f32 %v586, 0.0
    %v762 = vmax.f32 %v625, 0.0
    %v763 = vmax.f32 %v627, 0.0
    %v764 = vmax.f32 %v666, 0.0
    %v765 = vmax.f32 %v668, 0.0
    %v766 = vmax.f32 %v707, 0.0
    %v767 = vmax.f32 %v709, 0.0
    %v768 = vmax.f32 %v748, 0.0
    %v769 = vmax.f32 %v750, 0.0
    %v770 = vpack.c.bf16 %v754, %v754
    %v771 = vpack.c.bf16 %v755, %v755
    %v772 = vpack.c.bf16 %v756, %v756
    %v773 = vpack.c.bf16 %v757, %v757
    %v774 = vpack.c.bf16 %v758, %v758
    %v775 = vpack.c.bf16 %v759, %v759
    %v776 = vpack.c.bf16 %v760, %v760
    %v777 = vpack.c.bf16 %v761, %v761
    %v778 = vpack.c.bf16 %v762, %v762
    %v779 = vpack.c.bf16 %v763, %v763
    %v780 = vpack.c.bf16 %v764, %v764
    %v781 = vpack.c.bf16 %v765, %v765
    %v782 = vpack.c.bf16 %v766, %v766
    %v783 = vpack.c.bf16 %v767, %v767
    %v784 = vpack.c.bf16 %v768, %v768
    %v785 = vpack.c.bf16 %v769, %v769
    %v786 = vld [vmem:[#allocation4] sm:$0xf]
    %v787 = vld [vmem:[#allocation4 + $0x4] sm:$0xf]
    %v788 = vld [vmem:[#allocation4 + $0x8] sm:$0xf]
    %v789 = vld [vmem:[#allocation4 + $0xc] sm:$0xf]
    %v790 = vld [vmem:[#allocation4 + $0x10] sm:$0xf]
    %v791 = vld [vmem:[#allocation4 + $0x14] sm:$0xf]
    %v792 = vld [vmem:[#allocation4 + $0x18] sm:$0xf]
    %v793 = vld [vmem:[#allocation4 + $0x1c] sm:$0xf]
    %v794 = vld [vmem:[#allocation4 + $0x20] sm:$0xf]
    %v795 = vld [vmem:[#allocation4 + $0x24] sm:$0xf]
    %v796 = vld [vmem:[#allocation4 + $0x28] sm:$0xf]
    %v797 = vld [vmem:[#allocation4 + $0x2c] sm:$0xf]
    %v798 = vld [vmem:[#allocation4 + $0x30] sm:$0xf]
    %v799 = vld [vmem:[#allocation4 + $0x34] sm:$0xf]
    %v800 = vld [vmem:[#allocation4 + $0x38] sm:$0xf]
    %v801 = vld [vmem:[#allocation4 + $0x3c] sm:$0xf]
    %v802 = vld [vmem:[#allocation4 + $0x40] sm:$0xf]
    %v803 = vld [vmem:[#allocation4 + $0x44] sm:$0xf]
    %v804 = vld [vmem:[#allocation4 + $0x48] sm:$0xf]
    %v805 = vld [vmem:[#allocation4 + $0x4c] sm:$0xf]
    %v806 = vld [vmem:[#allocation4 + $0x50] sm:$0xf]
    %v807 = vld [vmem:[#allocation4 + $0x54] sm:$0xf]
    %v808 = vld [vmem:[#allocation4 + $0x58] sm:$0xf]
    %v809 = vld [vmem:[#allocation4 + $0x5c] sm:$0xf]
    %v810 = vld [vmem:[#allocation4 + $0x60] sm:$0xf]
    %v811 = vld [vmem:[#allocation4 + $0x64] sm:$0xf]
    %v812 = vld [vmem:[#allocation4 + $0x68] sm:$0xf]
    %v813 = vld [vmem:[#allocation4 + $0x6c] sm:$0xf]
    %v814 = vld [vmem:[#allocation4 + $0x70] sm:$0xf]
    %v815 = vld [vmem:[#allocation4 + $0x74] sm:$0xf]
    %v816 = vld [vmem:[#allocation4 + $0x78] sm:$0xf]
    %v817 = vld [vmem:[#allocation4 + $0x7c] sm:$0xf]
    %v818 = vld [vmem:[#allocation4 + $0x80] sm:$0xf]
    %v819 = vld [vmem:[#allocation4 + $0x84] sm:$0xf]
    %v820 = vld [vmem:[#allocation4 + $0x88] sm:$0xf]
    %v821 = vld [vmem:[#allocation4 + $0x8c] sm:$0xf]
    %v822 = vld [vmem:[#allocation4 + $0x90] sm:$0xf]
    %v823 = vld [vmem:[#allocation4 + $0x94] sm:$0xf]
    %v824 = vld [vmem:[#allocation4 + $0x98] sm:$0xf]
    %v825 = vld [vmem:[#allocation4 + $0x9c] sm:$0xf]
    %v826 = vld [vmem:[#allocation4 + $0xa0] sm:$0xf]
    %v827 = vld [vmem:[#allocation4 + $0xa4] sm:$0xf]
    %v828 = vld [vmem:[#allocation4 + $0xa8] sm:$0xf]
    %v829 = vld [vmem:[#allocation4 + $0xac] sm:$0xf]
    %v830 = vld [vmem:[#allocation4 + $0xb0] sm:$0xf]
    %v831 = vld [vmem:[#allocation4 + $0xb4] sm:$0xf]
    %v832 = vld [vmem:[#allocation4 + $0xb8] sm:$0xf]
    %v833 = vld [vmem:[#allocation4 + $0xbc] sm:$0xf]
    %v834 = vld [vmem:[#allocation4 + $0xc0] sm:$0xf]
    %v835 = vld [vmem:[#allocation4 + $0xc4] sm:$0xf]
    %v836 = vld [vmem:[#allocation4 + $0xc8] sm:$0xf]
    %v837 = vld [vmem:[#allocation4 + $0xcc] sm:$0xf]
    %v838 = vld [vmem:[#allocation4 + $0xd0] sm:$0xf]
    %v839 = vld [vmem:[#allocation4 + $0xd4] sm:$0xf]
    %v840 = vld [vmem:[#allocation4 + $0xd8] sm:$0xf]
    %v841 = vld [vmem:[#allocation4 + $0xdc] sm:$0xf]
    %v842 = vld [vmem:[#allocation4 + $0xe0] sm:$0xf]
    %v843 = vld [vmem:[#allocation4 + $0xe4] sm:$0xf]
    %v844 = vld [vmem:[#allocation4 + $0xe8] sm:$0xf]
    %v845 = vld [vmem:[#allocation4 + $0xec] sm:$0xf]
    %v846 = vld [vmem:[#allocation4 + $0xf0] sm:$0xf]
    %v847 = vld [vmem:[#allocation4 + $0xf4] sm:$0xf]
    %v848 = vld [vmem:[#allocation4 + $0xf8] sm:$0xf]
    %v849 = vld [vmem:[#allocation4 + $0xfc] sm:$0xf]
    %v850 = vld [vmem:[#allocation4 + $0x100] sm:$0xf]
    %v851 = vld [vmem:[#allocation4 + $0x104] sm:$0xf]
    %v852 = vld [vmem:[#allocation4 + $0x108] sm:$0xf]
    %v853 = vld [vmem:[#allocation4 + $0x10c] sm:$0xf]
    %v854 = vld [vmem:[#allocation4 + $0x110] sm:$0xf]
    %v855 = vld [vmem:[#allocation4 + $0x114] sm:$0xf]
    %v856 = vld [vmem:[#allocation4 + $0x118] sm:$0xf]
    %v857 = vld [vmem:[#allocation4 + $0x11c] sm:$0xf]
    %v858 = vld [vmem:[#allocation4 + $0x120] sm:$0xf]
    %v859 = vld [vmem:[#allocation4 + $0x124] sm:$0xf]
    %v860 = vld [vmem:[#allocation4 + $0x128] sm:$0xf]
    %v861 = vld [vmem:[#allocation4 + $0x12c] sm:$0xf]
    %v862 = vld [vmem:[#allocation4 + $0x130] sm:$0xf]
    %v863 = vld [vmem:[#allocation4 + $0x134] sm:$0xf]
    %v864 = vld [vmem:[#allocation4 + $0x138] sm:$0xf]
    %v865 = vld [vmem:[#allocation4 + $0x13c] sm:$0xf]
    %v866 = vld [vmem:[#allocation4 + $0x140] sm:$0xf]
    %v867 = vld [vmem:[#allocation4 + $0x144] sm:$0xf]
    %v868 = vld [vmem:[#allocation4 + $0x148] sm:$0xf]
    %v869 = vld [vmem:[#allocation4 + $0x14c] sm:$0xf]
    %v870 = vld [vmem:[#allocation4 + $0x150] sm:$0xf]
    %v871 = vld [vmem:[#allocation4 + $0x154] sm:$0xf]
    %v872 = vld [vmem:[#allocation4 + $0x158] sm:$0xf]
    %v873 = vld [vmem:[#allocation4 + $0x15c] sm:$0xf]
    %v874 = vld [vmem:[#allocation4 + $0x160] sm:$0xf]
    %v875 = vld [vmem:[#allocation4 + $0x164] sm:$0xf]
    %v876 = vld [vmem:[#allocation4 + $0x168] sm:$0xf]
    %v877 = vld [vmem:[#allocation4 + $0x16c] sm:$0xf]
    %v878 = vld [vmem:[#allocation4 + $0x170] sm:$0xf]
    %v879 = vld [vmem:[#allocation4 + $0x174] sm:$0xf]
    %v880 = vld [vmem:[#allocation4 + $0x178] sm:$0xf]
    %v881 = vld [vmem:[#allocation4 + $0x17c] sm:$0xf]
    %v882 = vld [vmem:[#allocation4 + $0x180] sm:$0xf]
    %v883 = vld [vmem:[#allocation4 + $0x184] sm:$0xf]
    %v884 = vld [vmem:[#allocation4 + $0x188] sm:$0xf]
    %v885 = vld [vmem:[#allocation4 + $0x18c] sm:$0xf]
    %v886 = vld [vmem:[#allocation4 + $0x190] sm:$0xf]
    %v887 = vld [vmem:[#allocation4 + $0x194] sm:$0xf]
    %v888 = vld [vmem:[#allocation4 + $0x198] sm:$0xf]
    %v889 = vld [vmem:[#allocation4 + $0x19c] sm:$0xf]
    %v890 = vld [vmem:[#allocation4 + $0x1a0] sm:$0xf]
    %v891 = vld [vmem:[#allocation4 + $0x1a4] sm:$0xf]
    %v892 = vld [vmem:[#allocation4 + $0x1a8] sm:$0xf]
    %v893 = vld [vmem:[#allocation4 + $0x1ac] sm:$0xf]
    %v894 = vld [vmem:[#allocation4 + $0x1b0] sm:$0xf]
    %v895 = vld [vmem:[#allocation4 + $0x1b4] sm:$0xf]
    %v896 = vld [vmem:[#allocation4 + $0x1b8] sm:$0xf]
    %v897 = vld [vmem:[#allocation4 + $0x1bc] sm:$0xf]
    %v898 = vld [vmem:[#allocation4 + $0x1c0] sm:$0xf]
    %v899 = vld [vmem:[#allocation4 + $0x1c4] sm:$0xf]
    %v900 = vld [vmem:[#allocation4 + $0x1c8] sm:$0xf]
    %v901 = vld [vmem:[#allocation4 + $0x1cc] sm:$0xf]
    %v902 = vld [vmem:[#allocation4 + $0x1d0] sm:$0xf]
    %v903 = vld [vmem:[#allocation4 + $0x1d4] sm:$0xf]
    %v904 = vld [vmem:[#allocation4 + $0x1d8] sm:$0xf]
    %v905 = vld [vmem:[#allocation4 + $0x1dc] sm:$0xf]
    %v906 = vld [vmem:[#allocation4 + $0x1e0] sm:$0xf]
    %v907 = vld [vmem:[#allocation4 + $0x1e4] sm:$0xf]
    %v908 = vld [vmem:[#allocation4 + $0x1e8] sm:$0xf]
    %v909 = vld [vmem:[#allocation4 + $0x1ec] sm:$0xf]
    %v910 = vld [vmem:[#allocation4 + $0x1f0] sm:$0xf]
    %v911 = vld [vmem:[#allocation4 + $0x1f4] sm:$0xf]
    %v912 = vld [vmem:[#allocation4 + $0x1f8] sm:$0xf]
    %v913 = vld [vmem:[#allocation4 + $0x1fc] sm:$0xf]
    %v914 = vld [vmem:[#allocation4 + $0x200] sm:$0xf]
    %v915 = vld [vmem:[#allocation4 + $0x204] sm:$0xf]
    %v916 = vld [vmem:[#allocation4 + $0x208] sm:$0xf]
    %v917 = vld [vmem:[#allocation4 + $0x20c] sm:$0xf]
    %v918 = vld [vmem:[#allocation4 + $0x210] sm:$0xf]
    %v919 = vld [vmem:[#allocation4 + $0x214] sm:$0xf]
    %v920 = vld [vmem:[#allocation4 + $0x218] sm:$0xf]
    %v921 = vld [vmem:[#allocation4 + $0x21c] sm:$0xf]
    %v922 = vld [vmem:[#allocation4 + $0x220] sm:$0xf]
    %v923 = vld [vmem:[#allocation4 + $0x224] sm:$0xf]
    %v924 = vld [vmem:[#allocation4 + $0x228] sm:$0xf]
    %v925 = vld [vmem:[#allocation4 + $0x22c] sm:$0xf]
    %v926 = vld [vmem:[#allocation4 + $0x230] sm:$0xf]
    %v927 = vld [vmem:[#allocation4 + $0x234] sm:$0xf]
    %v928 = vld [vmem:[#allocation4 + $0x238] sm:$0xf]
    %v929 = vld [vmem:[#allocation4 + $0x23c] sm:$0xf]
    %v930 = vld [vmem:[#allocation4 + $0x240] sm:$0xf]
    %v931 = vld [vmem:[#allocation4 + $0x244] sm:$0xf]
    %v932 = vld [vmem:[#allocation4 + $0x248] sm:$0xf]
    %v933 = vld [vmem:[#allocation4 + $0x24c] sm:$0xf]
    %v934 = vld [vmem:[#allocation4 + $0x250] sm:$0xf]
    %v935 = vld [vmem:[#allocation4 + $0x254] sm:$0xf]
    %v936 = vld [vmem:[#allocation4 + $0x258] sm:$0xf]
    %v937 = vld [vmem:[#allocation4 + $0x25c] sm:$0xf]
    %v938 = vld [vmem:[#allocation4 + $0x260] sm:$0xf]
    %v939 = vld [vmem:[#allocation4 + $0x264] sm:$0xf]
    %v940 = vld [vmem:[#allocation4 + $0x268] sm:$0xf]
    %v941 = vld [vmem:[#allocation4 + $0x26c] sm:$0xf]
    %v942 = vld [vmem:[#allocation4 + $0x270] sm:$0xf]
    %v943 = vld [vmem:[#allocation4 + $0x274] sm:$0xf]
    %v944 = vld [vmem:[#allocation4 + $0x278] sm:$0xf]
    %v945 = vld [vmem:[#allocation4 + $0x27c] sm:$0xf]
    %v946 = vld [vmem:[#allocation4 + $0x280] sm:$0xf]
    %v947 = vld [vmem:[#allocation4 + $0x284] sm:$0xf]
    %v948 = vld [vmem:[#allocation4 + $0x288] sm:$0xf]
    %v949 = vld [vmem:[#allocation4 + $0x28c] sm:$0xf]
    %v950 = vld [vmem:[#allocation4 + $0x290] sm:$0xf]
    %v951 = vld [vmem:[#allocation4 + $0x294] sm:$0xf]
    %v952 = vld [vmem:[#allocation4 + $0x298] sm:$0xf]
    %v953 = vld [vmem:[#allocation4 + $0x29c] sm:$0xf]
    %v954 = vld [vmem:[#allocation4 + $0x2a0] sm:$0xf]
    %v955 = vld [vmem:[#allocation4 + $0x2a4] sm:$0xf]
    %v956 = vld [vmem:[#allocation4 + $0x2a8] sm:$0xf]
    %v957 = vld [vmem:[#allocation4 + $0x2ac] sm:$0xf]
    %v958 = vld [vmem:[#allocation4 + $0x2b0] sm:$0xf]
    %v959 = vld [vmem:[#allocation4 + $0x2b4] sm:$0xf]
    %v960 = vld [vmem:[#allocation4 + $0x2b8] sm:$0xf]
    %v961 = vld [vmem:[#allocation4 + $0x2bc] sm:$0xf]
    %v962 = vld [vmem:[#allocation4 + $0x2c0] sm:$0xf]
    %v963 = vld [vmem:[#allocation4 + $0x2c4] sm:$0xf]
    %v964 = vld [vmem:[#allocation4 + $0x2c8] sm:$0xf]
    %v965 = vld [vmem:[#allocation4 + $0x2cc] sm:$0xf]
    %v966 = vld [vmem:[#allocation4 + $0x2d0] sm:$0xf]
    %v967 = vld [vmem:[#allocation4 + $0x2d4] sm:$0xf]
    %v968 = vld [vmem:[#allocation4 + $0x2d8] sm:$0xf]
    %v969 = vld [vmem:[#allocation4 + $0x2dc] sm:$0xf]
    %v970 = vld [vmem:[#allocation4 + $0x2e0] sm:$0xf]
    %v971 = vld [vmem:[#allocation4 + $0x2e4] sm:$0xf]
    %v972 = vld [vmem:[#allocation4 + $0x2e8] sm:$0xf]
    %v973 = vld [vmem:[#allocation4 + $0x2ec] sm:$0xf]
    %v974 = vld [vmem:[#allocation4 + $0x2f0] sm:$0xf]
    %v975 = vld [vmem:[#allocation4 + $0x2f4] sm:$0xf]
    %v976 = vld [vmem:[#allocation4 + $0x2f8] sm:$0xf]
    %v977 = vld [vmem:[#allocation4 + $0x2fc] sm:$0xf]
    %v978 = vld [vmem:[#allocation4 + $0x300] sm:$0xf]
    %v979 = vld [vmem:[#allocation4 + $0x304] sm:$0xf]
    %v980 = vld [vmem:[#allocation4 + $0x308] sm:$0xf]
    %v981 = vld [vmem:[#allocation4 + $0x30c] sm:$0xf]
    %v982 = vld [vmem:[#allocation4 + $0x310] sm:$0xf]
    %v983 = vld [vmem:[#allocation4 + $0x314] sm:$0xf]
    %v984 = vld [vmem:[#allocation4 + $0x318] sm:$0xf]
    %v985 = vld [vmem:[#allocation4 + $0x31c] sm:$0xf]
    %v986 = vld [vmem:[#allocation4 + $0x320] sm:$0xf]
    %v987 = vld [vmem:[#allocation4 + $0x324] sm:$0xf]
    %v988 = vld [vmem:[#allocation4 + $0x328] sm:$0xf]
    %v989 = vld [vmem:[#allocation4 + $0x32c] sm:$0xf]
    %v990 = vld [vmem:[#allocation4 + $0x330] sm:$0xf]
    %v991 = vld [vmem:[#allocation4 + $0x334] sm:$0xf]
    %v992 = vld [vmem:[#allocation4 + $0x338] sm:$0xf]
    %v993 = vld [vmem:[#allocation4 + $0x33c] sm:$0xf]
    %v994 = vld [vmem:[#allocation4 + $0x340] sm:$0xf]
    %v995 = vld [vmem:[#allocation4 + $0x344] sm:$0xf]
    %v996 = vld [vmem:[#allocation4 + $0x348] sm:$0xf]
    %v997 = vld [vmem:[#allocation4 + $0x34c] sm:$0xf]
    %v998 = vld [vmem:[#allocation4 + $0x350] sm:$0xf]
    %v999 = vld [vmem:[#allocation4 + $0x354] sm:$0xf]
    %v1000 = vld [vmem:[#allocation4 + $0x358] sm:$0xf]
    %v1001 = vld [vmem:[#allocation4 + $0x35c] sm:$0xf]
    %v1002 = vld [vmem:[#allocation4 + $0x360] sm:$0xf]
    %v1003 = vld [vmem:[#allocation4 + $0x364] sm:$0xf]
    %v1004 = vld [vmem:[#allocation4 + $0x368] sm:$0xf]
    %v1005 = vld [vmem:[#allocation4 + $0x36c] sm:$0xf]
    %v1006 = vld [vmem:[#allocation4 + $0x370] sm:$0xf]
    %v1007 = vld [vmem:[#allocation4 + $0x374] sm:$0xf]
    %v1008 = vld [vmem:[#allocation4 + $0x378] sm:$0xf]
    %v1009 = vld [vmem:[#allocation4 + $0x37c] sm:$0xf]
    %v1010 = vld [vmem:[#allocation4 + $0x380] sm:$0xf]
    %v1011 = vld [vmem:[#allocation4 + $0x384] sm:$0xf]
    %v1012 = vld [vmem:[#allocation4 + $0x388] sm:$0xf]
    %v1013 = vld [vmem:[#allocation4 + $0x38c] sm:$0xf]
    %v1014 = vld [vmem:[#allocation4 + $0x390] sm:$0xf]
    %v1015 = vld [vmem:[#allocation4 + $0x394] sm:$0xf]
    %v1016 = vld [vmem:[#allocation4 + $0x398] sm:$0xf]
    %v1017 = vld [vmem:[#allocation4 + $0x39c] sm:$0xf]
    %v1018 = vld [vmem:[#allocation4 + $0x3a0] sm:$0xf]
    %v1019 = vld [vmem:[#allocation4 + $0x3a4] sm:$0xf]
    %v1020 = vld [vmem:[#allocation4 + $0x3a8] sm:$0xf]
    %v1021 = vld [vmem:[#allocation4 + $0x3ac] sm:$0xf]
    %v1022 = vld [vmem:[#allocation4 + $0x3b0] sm:$0xf]
    %v1023 = vld [vmem:[#allocation4 + $0x3b4] sm:$0xf]
    %v1024 = vld [vmem:[#allocation4 + $0x3b8] sm:$0xf]
    %v1025 = vld [vmem:[#allocation4 + $0x3bc] sm:$0xf]
    %v1026 = vld [vmem:[#allocation4 + $0x3c0] sm:$0xf]
    %v1027 = vld [vmem:[#allocation4 + $0x3c4] sm:$0xf]
    %v1028 = vld [vmem:[#allocation4 + $0x3c8] sm:$0xf]
    %v1029 = vld [vmem:[#allocation4 + $0x3cc] sm:$0xf]
    %v1030 = vld [vmem:[#allocation4 + $0x3d0] sm:$0xf]
    %v1031 = vld [vmem:[#allocation4 + $0x3d4] sm:$0xf]
    %v1032 = vld [vmem:[#allocation4 + $0x3d8] sm:$0xf]
    %v1033 = vld [vmem:[#allocation4 + $0x3dc] sm:$0xf]
    %v1034 = vld [vmem:[#allocation4 + $0x3e0] sm:$0xf]
    %v1035 = vld [vmem:[#allocation4 + $0x3e4] sm:$0xf]
    %v1036 = vld [vmem:[#allocation4 + $0x3e8] sm:$0xf]
    %v1037 = vld [vmem:[#allocation4 + $0x3ec] sm:$0xf]
    %v1038 = vld [vmem:[#allocation4 + $0x3f0] sm:$0xf]
    %v1039 = vld [vmem:[#allocation4 + $0x3f4] sm:$0xf]
    %v1040 = vld [vmem:[#allocation4 + $0x3f8] sm:$0xf]
    %v1041 = vld [vmem:[#allocation4 + $0x3fc] sm:$0xf]
    %v1043 = vlaneseq
    %v1044 = vshrl.u32 %v1043, 7
    %v1045 = vsub.s32 0, %v1044
    %v1046 = vrot.slane %v48, %v1045
    %v1304 = vunpack.c.l.b16 %v786
    %v1305 = vunpack.c.l.b16 %v787
    %v1306 = vunpack.c.l.b16 %v788
    %v1307 = vunpack.c.l.b16 %v789
    %v1308 = vunpack.c.l.b16 %v790
    %v1309 = vunpack.c.l.b16 %v791
    %v1310 = vunpack.c.l.b16 %v792
    %v1311 = vunpack.c.l.b16 %v793
    %v1312 = vunpack.c.l.b16 %v794
    %v1313 = vunpack.c.l.b16 %v795
    %v1314 = vunpack.c.l.b16 %v796
    %v1315 = vunpack.c.l.b16 %v797
    %v1316 = vunpack.c.l.b16 %v798
    %v1317 = vunpack.c.l.b16 %v799
    %v1318 = vunpack.c.l.b16 %v800
    %v1319 = vunpack.c.l.b16 %v801
    %v1320 = vunpack.c.l.b16 %v802
    %v1321 = vunpack.c.l.b16 %v803
    %v1322 = vunpack.c.l.b16 %v804
    %v1323 = vunpack.c.l.b16 %v805
    %v1324 = vunpack.c.l.b16 %v806
    %v1325 = vunpack.c.l.b16 %v807
    %v1326 = vunpack.c.l.b16 %v808
    %v1327 = vunpack.c.l.b16 %v809
    %v1328 = vunpack.c.l.b16 %v810
    %v1329 = vunpack.c.l.b16 %v811
    %v1330 = vunpack.c.l.b16 %v812
    %v1331 = vunpack.c.l.b16 %v813
    %v1332 = vunpack.c.l.b16 %v814
    %v1333 = vunpack.c.l.b16 %v815
    %v1334 = vunpack.c.l.b16 %v816
    %v1335 = vunpack.c.l.b16 %v817
    %v1336 = vunpack.c.l.b16 %v818
    %v1337 = vunpack.c.l.b16 %v819
    %v1338 = vunpack.c.l.b16 %v820
    %v1339 = vunpack.c.l.b16 %v821
    %v1340 = vunpack.c.l.b16 %v822
    %v1341 = vunpack.c.l.b16 %v823
    %v1342 = vunpack.c.l.b16 %v824
    %v1343 = vunpack.c.l.b16 %v825
    %v1344 = vunpack.c.l.b16 %v826
    %v1345 = vunpack.c.l.b16 %v827
    %v1346 = vunpack.c.l.b16 %v828
    %v1347 = vunpack.c.l.b16 %v829
    %v1348 = vunpack.c.l.b16 %v830
    %v1349 = vunpack.c.l.b16 %v831
    %v1350 = vunpack.c.l.b16 %v832
    %v1351 = vunpack.c.l.b16 %v833
    %v1352 = vunpack.c.l.b16 %v834
    %v1353 = vunpack.c.l.b16 %v835
    %v1354 = vunpack.c.l.b16 %v836
    %v1355 = vunpack.c.l.b16 %v837
    %v1356 = vunpack.c.l.b16 %v838
    %v1357 = vunpack.c.l.b16 %v839
    %v1358 = vunpack.c.l.b16 %v840
    %v1359 = vunpack.c.l.b16 %v841
    %v1360 = vunpack.c.l.b16 %v842
    %v1361 = vunpack.c.l.b16 %v843
    %v1362 = vunpack.c.l.b16 %v844
    %v1363 = vunpack.c.l.b16 %v845
    %v1364 = vunpack.c.l.b16 %v846
    %v1365 = vunpack.c.l.b16 %v847
    %v1366 = vunpack.c.l.b16 %v848
    %v1367 = vunpack.c.l.b16 %v849
    %v1368 = vunpack.c.l.b16 %v850
    %v1369 = vunpack.c.l.b16 %v851
    %v1370 = vunpack.c.l.b16 %v852
    %v1371 = vunpack.c.l.b16 %v853
    %v1372 = vunpack.c.l.b16 %v854
    %v1373 = vunpack.c.l.b16 %v855
    %v1374 = vunpack.c.l.b16 %v856
    %v1375 = vunpack.c.l.b16 %v857
    %v1376 = vunpack.c.l.b16 %v858
    %v1377 = vunpack.c.l.b16 %v859
    %v1378 = vunpack.c.l.b16 %v860
    %v1379 = vunpack.c.l.b16 %v861
    %v1380 = vunpack.c.l.b16 %v862
    %v1381 = vunpack.c.l.b16 %v863
    %v1382 = vunpack.c.l.b16 %v864
    %v1383 = vunpack.c.l.b16 %v865
    %v1384 = vunpack.c.l.b16 %v866
    %v1385 = vunpack.c.l.b16 %v867
    %v1386 = vunpack.c.l.b16 %v868
    %v1387 = vunpack.c.l.b16 %v869
    %v1388 = vunpack.c.l.b16 %v870
    %v1389 = vunpack.c.l.b16 %v871
    %v1390 = vunpack.c.l.b16 %v872
    %v1391 = vunpack.c.l.b16 %v873
    %v1392 = vunpack.c.l.b16 %v874
    %v1393 = vunpack.c.l.b16 %v875
    %v1394 = vunpack.c.l.b16 %v876
    %v1395 = vunpack.c.l.b16 %v877
    %v1396 = vunpack.c.l.b16 %v878
    %v1397 = vunpack.c.l.b16 %v879
    %v1398 = vunpack.c.l.b16 %v880
    %v1399 = vunpack.c.l.b16 %v881
    %v1400 = vunpack.c.l.b16 %v882
    %v1401 = vunpack.c.l.b16 %v883
    %v1402 = vunpack.c.l.b16 %v884
    %v1403 = vunpack.c.l.b16 %v885
    %v1404 = vunpack.c.l.b16 %v886
    %v1405 = vunpack.c.l.b16 %v887
    %v1406 = vunpack.c.l.b16 %v888
    %v1407 = vunpack.c.l.b16 %v889
    %v1408 = vunpack.c.l.b16 %v890
    %v1409 = vunpack.c.l.b16 %v891
    %v1410 = vunpack.c.l.b16 %v892
    %v1411 = vunpack.c.l.b16 %v893
    %v1412 = vunpack.c.l.b16 %v894
    %v1413 = vunpack.c.l.b16 %v895
    %v1414 = vunpack.c.l.b16 %v896
    %v1415 = vunpack.c.l.b16 %v897
    %v1416 = vunpack.c.l.b16 %v898
    %v1417 = vunpack.c.l.b16 %v899
    %v1418 = vunpack.c.l.b16 %v900
    %v1419 = vunpack.c.l.b16 %v901
    %v1420 = vunpack.c.l.b16 %v902
    %v1421 = vunpack.c.l.b16 %v903
    %v1422 = vunpack.c.l.b16 %v904
    %v1423 = vunpack.c.l.b16 %v905
    %v1424 = vunpack.c.l.b16 %v906
    %v1425 = vunpack.c.l.b16 %v907
    %v1426 = vunpack.c.l.b16 %v908
    %v1427 = vunpack.c.l.b16 %v909
    %v1428 = vunpack.c.l.b16 %v910
    %v1429 = vunpack.c.l.b16 %v911
    %v1430 = vunpack.c.l.b16 %v912
    %v1431 = vunpack.c.l.b16 %v913
    %v1432 = vunpack.c.l.b16 %v914
    %v1433 = vunpack.c.l.b16 %v915
    %v1434 = vunpack.c.l.b16 %v916
    %v1435 = vunpack.c.l.b16 %v917
    %v1436 = vunpack.c.l.b16 %v918
    %v1437 = vunpack.c.l.b16 %v919
    %v1438 = vunpack.c.l.b16 %v920
    %v1439 = vunpack.c.l.b16 %v921
    %v1440 = vunpack.c.l.b16 %v922
    %v1441 = vunpack.c.l.b16 %v923
    %v1442 = vunpack.c.l.b16 %v924
    %v1443 = vunpack.c.l.b16 %v925
    %v1444 = vunpack.c.l.b16 %v926
    %v1445 = vunpack.c.l.b16 %v927
    %v1446 = vunpack.c.l.b16 %v928
    %v1447 = vunpack.c.l.b16 %v929
    %v1448 = vunpack.c.l.b16 %v930
    %v1449 = vunpack.c.l.b16 %v931
    %v1450 = vunpack.c.l.b16 %v932
    %v1451 = vunpack.c.l.b16 %v933
    %v1452 = vunpack.c.l.b16 %v934
    %v1453 = vunpack.c.l.b16 %v935
    %v1454 = vunpack.c.l.b16 %v936
    %v1455 = vunpack.c.l.b16 %v937
    %v1456 = vunpack.c.l.b16 %v938
    %v1457 = vunpack.c.l.b16 %v939
    %v1458 = vunpack.c.l.b16 %v940
    %v1459 = vunpack.c.l.b16 %v941
    %v1460 = vunpack.c.l.b16 %v942
    %v1461 = vunpack.c.l.b16 %v943
    %v1462 = vunpack.c.l.b16 %v944
    %v1463 = vunpack.c.l.b16 %v945
    %v1464 = vunpack.c.l.b16 %v946
    %v1465 = vunpack.c.l.b16 %v947
    %v1466 = vunpack.c.l.b16 %v948
    %v1467 = vunpack.c.l.b16 %v949
    %v1468 = vunpack.c.l.b16 %v950
    %v1469 = vunpack.c.l.b16 %v951
    %v1470 = vunpack.c.l.b16 %v952
    %v1471 = vunpack.c.l.b16 %v953
    %v1472 = vunpack.c.l.b16 %v954
    %v1473 = vunpack.c.l.b16 %v955
    %v1474 = vunpack.c.l.b16 %v956
    %v1475 = vunpack.c.l.b16 %v957
    %v1476 = vunpack.c.l.b16 %v958
    %v1477 = vunpack.c.l.b16 %v959
    %v1478 = vunpack.c.l.b16 %v960
    %v1479 = vunpack.c.l.b16 %v961
    %v1480 = vunpack.c.l.b16 %v962
    %v1481 = vunpack.c.l.b16 %v963
    %v1482 = vunpack.c.l.b16 %v964
    %v1483 = vunpack.c.l.b16 %v965
    %v1484 = vunpack.c.l.b16 %v966
    %v1485 = vunpack.c.l.b16 %v967
    %v1486 = vunpack.c.l.b16 %v968
    %v1487 = vunpack.c.l.b16 %v969
    %v1488 = vunpack.c.l.b16 %v970
    %v1489 = vunpack.c.l.b16 %v971
    %v1490 = vunpack.c.l.b16 %v972
    %v1491 = vunpack.c.l.b16 %v973
    %v1492 = vunpack.c.l.b16 %v974
    %v1493 = vunpack.c.l.b16 %v975
    %v1494 = vunpack.c.l.b16 %v976
    %v1495 = vunpack.c.l.b16 %v977
    %v1496 = vunpack.c.l.b16 %v978
    %v1497 = vunpack.c.l.b16 %v979
    %v1498 = vunpack.c.l.b16 %v980
    %v1499 = vunpack.c.l.b16 %v981
    %v1500 = vunpack.c.l.b16 %v982
    %v1501 = vunpack.c.l.b16 %v983
    %v1502 = vunpack.c.l.b16 %v984
    %v1503 = vunpack.c.l.b16 %v985
    %v1504 = vunpack.c.l.b16 %v986
    %v1505 = vunpack.c.l.b16 %v987
    %v1506 = vunpack.c.l.b16 %v988
    %v1507 = vunpack.c.l.b16 %v989
    %v1508 = vunpack.c.l.b16 %v990
    %v1509 = vunpack.c.l.b16 %v991
    %v1510 = vunpack.c.l.b16 %v992
    %v1511 = vunpack.c.l.b16 %v993
    %v1512 = vunpack.c.l.b16 %v994
    %v1513 = vunpack.c.l.b16 %v995
    %v1514 = vunpack.c.l.b16 %v996
    %v1515 = vunpack.c.l.b16 %v997
    %v1516 = vunpack.c.l.b16 %v998
    %v1517 = vunpack.c.l.b16 %v999
    %v1518 = vunpack.c.l.b16 %v1000
    %v1519 = vunpack.c.l.b16 %v1001
    %v1520 = vunpack.c.l.b16 %v1002
    %v1521 = vunpack.c.l.b16 %v1003
    %v1522 = vunpack.c.l.b16 %v1004
    %v1523 = vunpack.c.l.b16 %v1005
    %v1524 = vunpack.c.l.b16 %v1006
    %v1525 = vunpack.c.l.b16 %v1007
    %v1526 = vunpack.c.l.b16 %v1008
    %v1527 = vunpack.c.l.b16 %v1009
    %v1528 = vunpack.c.l.b16 %v1010
    %v1529 = vunpack.c.l.b16 %v1011
    %v1530 = vunpack.c.l.b16 %v1012
    %v1531 = vunpack.c.l.b16 %v1013
    %v1532 = vunpack.c.l.b16 %v1014
    %v1533 = vunpack.c.l.b16 %v1015
    %v1534 = vunpack.c.l.b16 %v1016
    %v1535 = vunpack.c.l.b16 %v1017
    %v1536 = vunpack.c.l.b16 %v1018
    %v1537 = vunpack.c.l.b16 %v1019
    %v1538 = vunpack.c.l.b16 %v1020
    %v1539 = vunpack.c.l.b16 %v1021
    %v1540 = vunpack.c.l.b16 %v1022
    %v1541 = vunpack.c.l.b16 %v1023
    %v1542 = vunpack.c.l.b16 %v1024
    %v1543 = vunpack.c.l.b16 %v1025
    %v1544 = vunpack.c.l.b16 %v1026
    %v1545 = vunpack.c.l.b16 %v1027
    %v1546 = vunpack.c.l.b16 %v1028
    %v1547 = vunpack.c.l.b16 %v1029
    %v1548 = vunpack.c.l.b16 %v1030
    %v1549 = vunpack.c.l.b16 %v1031
    %v1550 = vunpack.c.l.b16 %v1032
    %v1551 = vunpack.c.l.b16 %v1033
    %v1552 = vunpack.c.l.b16 %v1034
    %v1553 = vunpack.c.l.b16 %v1035
    %v1554 = vunpack.c.l.b16 %v1036
    %v1555 = vunpack.c.l.b16 %v1037
    %v1556 = vunpack.c.l.b16 %v1038
    %v1557 = vunpack.c.l.b16 %v1039
    %v1558 = vunpack.c.l.b16 %v1040
    %v1559 = vunpack.c.l.b16 %v1041
    %v1560 = vpack.c.b16 %v1305, %v1304
    %v1561 = vpack.c.b16 %v1307, %v1306
    %v1562 = vpack.c.b16 %v1309, %v1308
    %v1563 = vpack.c.b16 %v1311, %v1310
    %v1564 = vpack.c.b16 %v1313, %v1312
    %v1565 = vpack.c.b16 %v1315, %v1314
    %v1566 = vpack.c.b16 %v1317, %v1316
    %v1567 = vpack.c.b16 %v1319, %v1318
    %v1568 = vpack.c.b16 %v1321, %v1320
    %v1569 = vpack.c.b16 %v1323, %v1322
    %v1570 = vpack.c.b16 %v1325, %v1324
    %v1571 = vpack.c.b16 %v1327, %v1326
    %v1572 = vpack.c.b16 %v1329, %v1328
    %v1573 = vpack.c.b16 %v1331, %v1330
    %v1574 = vpack.c.b16 %v1333, %v1332
    %v1575 = vpack.c.b16 %v1335, %v1334
    %v1576 = vpack.c.b16 %v1337, %v1336
    %v1577 = vpack.c.b16 %v1339, %v1338
    %v1578 = vpack.c.b16 %v1341, %v1340
    %v1579 = vpack.c.b16 %v1343, %v1342
    %v1580 = vpack.c.b16 %v1345, %v1344
    %v1581 = vpack.c.b16 %v1347, %v1346
    %v1582 = vpack.c.b16 %v1349, %v1348
    %v1583 = vpack.c.b16 %v1351, %v1350
    %v1584 = vpack.c.b16 %v1353, %v1352
    %v1585 = vpack.c.b16 %v1355, %v1354
    %v1586 = vpack.c.b16 %v1357, %v1356
    %v1587 = vpack.c.b16 %v1359, %v1358
    %v1588 = vpack.c.b16 %v1361, %v1360
    %v1589 = vpack.c.b16 %v1363, %v1362
    %v1590 = vpack.c.b16 %v1365, %v1364
    %v1591 = vpack.c.b16 %v1367, %v1366
    %v1592 = vpack.c.b16 %v1369, %v1368
    %v1593 = vpack.c.b16 %v1371, %v1370
    %v1594 = vpack.c.b16 %v1373, %v1372
    %v1595 = vpack.c.b16 %v1375, %v1374
    %v1596 = vpack.c.b16 %v1377, %v1376
    %v1597 = vpack.c.b16 %v1379, %v1378
    %v1598 = vpack.c.b16 %v1381, %v1380
    %v1599 = vpack.c.b16 %v1383, %v1382
    %v1600 = vpack.c.b16 %v1385, %v1384
    %v1601 = vpack.c.b16 %v1387, %v1386
    %v1602 = vpack.c.b16 %v1389, %v1388
    %v1603 = vpack.c.b16 %v1391, %v1390
    %v1604 = vpack.c.b16 %v1393, %v1392
    %v1605 = vpack.c.b16 %v1395, %v1394
    %v1606 = vpack.c.b16 %v1397, %v1396
    %v1607 = vpack.c.b16 %v1399, %v1398
    %v1608 = vpack.c.b16 %v1401, %v1400
    %v1609 = vpack.c.b16 %v1403, %v1402
    %v1610 = vpack.c.b16 %v1405, %v1404
    %v1611 = vpack.c.b16 %v1407, %v1406
    %v1612 = vpack.c.b16 %v1409, %v1408
    %v1613 = vpack.c.b16 %v1411, %v1410
    %v1614 = vpack.c.b16 %v1413, %v1412
    %v1615 = vpack.c.b16 %v1415, %v1414
    %v1616 = vpack.c.b16 %v1417, %v1416
    %v1617 = vpack.c.b16 %v1419, %v1418
    %v1618 = vpack.c.b16 %v1421, %v1420
    %v1619 = vpack.c.b16 %v1423, %v1422
    %v1620 = vpack.c.b16 %v1425, %v1424
    %v1621 = vpack.c.b16 %v1427, %v1426
    %v1622 = vpack.c.b16 %v1429, %v1428
    %v1623 = vpack.c.b16 %v1431, %v1430
    %v1624 = vpack.c.b16 %v1433, %v1432
    %v1625 = vpack.c.b16 %v1435, %v1434
    %v1626 = vpack.c.b16 %v1437, %v1436
    %v1627 = vpack.c.b16 %v1439, %v1438
    %v1628 = vpack.c.b16 %v1441, %v1440
    %v1629 = vpack.c.b16 %v1443, %v1442
    %v1630 = vpack.c.b16 %v1445, %v1444
    %v1631 = vpack.c.b16 %v1447, %v1446
    %v1632 = vpack.c.b16 %v1449, %v1448
    %v1633 = vpack.c.b16 %v1451, %v1450
    %v1634 = vpack.c.b16 %v1453, %v1452
    %v1635 = vpack.c.b16 %v1455, %v1454
    %v1636 = vpack.c.b16 %v1457, %v1456
    %v1637 = vpack.c.b16 %v1459, %v1458
    %v1638 = vpack.c.b16 %v1461, %v1460
    %v1639 = vpack.c.b16 %v1463, %v1462
    %v1640 = vpack.c.b16 %v1465, %v1464
    %v1641 = vpack.c.b16 %v1467, %v1466
    %v1642 = vpack.c.b16 %v1469, %v1468
    %v1643 = vpack.c.b16 %v1471, %v1470
    %v1644 = vpack.c.b16 %v1473, %v1472
    %v1645 = vpack.c.b16 %v1475, %v1474
    %v1646 = vpack.c.b16 %v1477, %v1476
    %v1647 = vpack.c.b16 %v1479, %v1478
    %v1648 = vpack.c.b16 %v1481, %v1480
    %v1649 = vpack.c.b16 %v1483, %v1482
    %v1650 = vpack.c.b16 %v1485, %v1484
    %v1651 = vpack.c.b16 %v1487, %v1486
    %v1652 = vpack.c.b16 %v1489, %v1488
    %v1653 = vpack.c.b16 %v1491, %v1490
    %v1654 = vpack.c.b16 %v1493, %v1492
    %v1655 = vpack.c.b16 %v1495, %v1494
    %v1656 = vpack.c.b16 %v1497, %v1496
    %v1657 = vpack.c.b16 %v1499, %v1498
    %v1658 = vpack.c.b16 %v1501, %v1500
    %v1659 = vpack.c.b16 %v1503, %v1502
    %v1660 = vpack.c.b16 %v1505, %v1504
    %v1661 = vpack.c.b16 %v1507, %v1506
    %v1662 = vpack.c.b16 %v1509, %v1508
    %v1663 = vpack.c.b16 %v1511, %v1510
    %v1664 = vpack.c.b16 %v1513, %v1512
    %v1665 = vpack.c.b16 %v1515, %v1514
    %v1666 = vpack.c.b16 %v1517, %v1516
    %v1667 = vpack.c.b16 %v1519, %v1518
    %v1668 = vpack.c.b16 %v1521, %v1520
    %v1669 = vpack.c.b16 %v1523, %v1522
    %v1670 = vpack.c.b16 %v1525, %v1524
    %v1671 = vpack.c.b16 %v1527, %v1526
    %v1672 = vpack.c.b16 %v1529, %v1528
    %v1673 = vpack.c.b16 %v1531, %v1530
    %v1674 = vpack.c.b16 %v1533, %v1532
    %v1675 = vpack.c.b16 %v1535, %v1534
    %v1676 = vpack.c.b16 %v1537, %v1536
    %v1677 = vpack.c.b16 %v1539, %v1538
    %v1678 = vpack.c.b16 %v1541, %v1540
    %v1679 = vpack.c.b16 %v1543, %v1542
    %v1680 = vpack.c.b16 %v1545, %v1544
    %v1681 = vpack.c.b16 %v1547, %v1546
    %v1682 = vpack.c.b16 %v1549, %v1548
    %v1683 = vpack.c.b16 %v1551, %v1550
    %v1684 = vpack.c.b16 %v1553, %v1552
    %v1685 = vpack.c.b16 %v1555, %v1554
    %v1686 = vpack.c.b16 %v1557, %v1556
    %v1687 = vpack.c.b16 %v1559, %v1558
    %1816 = vmatprep.subr.bf16.mxu0 0
    %1817 = vmatpush1.bf16.msra.mxu0 %v1560
    %1818 = vmatprep.subr.bf16.mxu0 0
    %1819 = vmatpush1.bf16.msra.mxu0 %v1561
    %1820 = vmatprep.subr.bf16.mxu0 0
    %1821 = vmatpush1.bf16.msra.mxu0 %v1562
    %1822 = vmatprep.subr.bf16.mxu0 0
    %1823 = vmatpush1.bf16.msra.mxu0 %v1563
    %1824 = vmatprep.subr.bf16.mxu0 0
    %1825 = vmatpush1.bf16.msra.mxu0 %v1564
    %1826 = vmatprep.subr.bf16.mxu0 0
    %1827 = vmatpush1.bf16.msra.mxu0 %v1565
    %1828 = vmatprep.subr.bf16.mxu0 0
    %1829 = vmatpush1.bf16.msra.mxu0 %v1566
    %1830 = vmatprep.subr.bf16.mxu0 0
    %1831 = vmatpush1.bf16.msra.mxu0 %v1567
    %1832 = vmatprep.subr.bf16.mxu0 0
    %1833 = vmatpush1.bf16.msra.mxu0 %v1568
    %1834 = vmatprep.subr.bf16.mxu0 0
    %1835 = vmatpush1.bf16.msra.mxu0 %v1569
    %1836 = vmatprep.subr.bf16.mxu0 0
    %1837 = vmatpush1.bf16.msra.mxu0 %v1570
    %1838 = vmatprep.subr.bf16.mxu0 0
    %1839 = vmatpush1.bf16.msra.mxu0 %v1571
    %1840 = vmatprep.subr.bf16.mxu0 0
    %1841 = vmatpush1.bf16.msra.mxu0 %v1572
    %1842 = vmatprep.subr.bf16.mxu0 0
    %1843 = vmatpush1.bf16.msra.mxu0 %v1573
    %1844 = vmatprep.subr.bf16.mxu0 0
    %1845 = vmatpush1.bf16.msra.mxu0 %v1574
    %1846 = vmatprep.subr.bf16.mxu0 0
    %1847 = vmatpush1.bf16.msra.mxu0 %v1575
    %1848 = vmatprep.mubr.bf16.mxu0 %v771
    %1849 = vmatmul.mubr.bf16.gmra.mrb[0].mxu0 %v770
    %v1850 = vpop.f32.mrb[0].mxu0
    %v1851 = vadd.f32 %v1046, %v1850
    %v1852 = vpop.f32.mrb[0].mxu0
    %v1853 = vpop.f32.mrb[0].mxu0
    %v1854 = vpop.f32.mrb[0].mxu0
    %1855 = vdwg.mxu0
    %1856 = vmatprep.subr.bf16.mxu0 0
    %1857 = vmatpush1.bf16.msra.mxu0 %v1576
    %1858 = vmatprep.subr.bf16.mxu0 0
    %1859 = vmatpush1.bf16.msra.mxu0 %v1577
    %1860 = vmatprep.subr.bf16.mxu0 0
    %1861 = vmatpush1.bf16.msra.mxu0 %v1578
    %1862 = vmatprep.subr.bf16.mxu0 0
    %1863 = vmatpush1.bf16.msra.mxu0 %v1579
    %1864 = vmatprep.subr.bf16.mxu0 0
    %1865 = vmatpush1.bf16.msra.mxu0 %v1580
    %1866 = vmatprep.subr.bf16.mxu0 0
    %1867 = vmatpush1.bf16.msra.mxu0 %v1581
    %1868 = vmatprep.subr.bf16.mxu0 0
    %1869 = vmatpush1.bf16.msra.mxu0 %v1582
    %1870 = vmatprep.subr.bf16.mxu0 0
    %1871 = vmatpush1.bf16.msra.mxu0 %v1583
    %1872 = vmatprep.subr.bf16.mxu0 0
    %1873 = vmatpush1.bf16.msra.mxu0 %v1584
    %1874 = vmatprep.subr.bf16.mxu0 0
    %1875 = vmatpush1.bf16.msra.mxu0 %v1585
    %1876 = vmatprep.subr.bf16.mxu0 0
    %1877 = vmatpush1.bf16.msra.mxu0 %v1586
    %1878 = vmatprep.subr.bf16.mxu0 0
    %1879 = vmatpush1.bf16.msra.mxu0 %v1587
    %1880 = vmatprep.subr.bf16.mxu0 0
    %1881 = vmatpush1.bf16.msra.mxu0 %v1588
    %1882 = vmatprep.subr.bf16.mxu0 0
    %1883 = vmatpush1.bf16.msra.mxu0 %v1589
    %1884 = vmatprep.subr.bf16.mxu0 0
    %1885 = vmatpush1.bf16.msra.mxu0 %v1590
    %1886 = vmatprep.subr.bf16.mxu0 0
    %1887 = vmatpush1.bf16.msra.mxu0 %v1591
    %1888 = vmatprep.mubr.bf16.mxu0 %v773
    %1889 = vmatmul.mubr.bf16.gmra.mrb[0].mxu0 %v772
    %v1890 = vpop.f32.mrb[0].mxu0
    %v1891 = vadd.f32 %v1851, %v1890
    %v1892 = vpop.f32.mrb[0].mxu0
    %v1893 = vpop.f32.mrb[0].mxu0
    %v1894 = vpop.f32.mrb[0].mxu0
    %1895 = vdwg.mxu0
    %1896 = vmatprep.subr.bf16.mxu0 0
    %1897 = vmatpush1.bf16.msra.mxu0 %v1592
    %1898 = vmatprep.subr.bf16.mxu0 0
    %1899 = vmatpush1.bf16.msra.mxu0 %v1593
    %1900 = vmatprep.subr.bf16.mxu0 0
    %1901 = vmatpush1.bf16.msra.mxu0 %v1594
    %1902 = vmatprep.subr.bf16.mxu0 0
    %1903 = vmatpush1.bf16.msra.mxu0 %v1595
    %1904 = vmatprep.subr.bf16.mxu0 0
    %1905 = vmatpush1.bf16.msra.mxu0 %v1596
    %1906 = vmatprep.subr.bf16.mxu0 0
    %1907 = vmatpush1.bf16.msra.mxu0 %v1597
    %1908 = vmatprep.subr.bf16.mxu0 0
    %1909 = vmatpush1.bf16.msra.mxu0 %v1598
    %1910 = vmatprep.subr.bf16.mxu0 0
    %1911 = vmatpush1.bf16.msra.mxu0 %v1599
    %1912 = vmatprep.subr.bf16.mxu0 0
    %1913 = vmatpush1.bf16.msra.mxu0 %v1600
    %1914 = vmatprep.subr.bf16.mxu0 0
    %1915 = vmatpush1.bf16.msra.mxu0 %v1601
    %1916 = vmatprep.subr.bf16.mxu0 0
    %1917 = vmatpush1.bf16.msra.mxu0 %v1602
    %1918 = vmatprep.subr.bf16.mxu0 0
    %1919 = vmatpush1.bf16.msra.mxu0 %v1603
    %1920 = vmatprep.subr.bf16.mxu0 0
    %1921 = vmatpush1.bf16.msra.mxu0 %v1604
    %1922 = vmatprep.subr.bf16.mxu0 0
    %1923 = vmatpush1.bf16.msra.mxu0 %v1605
    %1924 = vmatprep.subr.bf16.mxu0 0
    %1925 = vmatpush1.bf16.msra.mxu0 %v1606
    %1926 = vmatprep.subr.bf16.mxu0 0
    %1927 = vmatpush1.bf16.msra.mxu0 %v1607
    %1928 = vmatprep.mubr.bf16.mxu0 %v775
    %1929 = vmatmul.mubr.bf16.gmra.mrb[0].mxu0 %v774
    %v1930 = vpop.f32.mrb[0].mxu0
    %v1931 = vadd.f32 %v1891, %v1930
    %v1932 = vpop.f32.mrb[0].mxu0
    %v1933 = vpop.f32.mrb[0].mxu0
    %v1934 = vpop.f32.mrb[0].mxu0
    %1935 = vdwg.mxu0
    %1936 = vmatprep.subr.bf16.mxu0 0
    %1937 = vmatpush1.bf16.msra.mxu0 %v1608
    %1938 = vmatprep.subr.bf16.mxu0 0
    %1939 = vmatpush1.bf16.msra.mxu0 %v1609
    %1940 = vmatprep.subr.bf16.mxu0 0
    %1941 = vmatpush1.bf16.msra.mxu0 %v1610
    %1942 = vmatprep.subr.bf16.mxu0 0
    %1943 = vmatpush1.bf16.msra.mxu0 %v1611
    %1944 = vmatprep.subr.bf16.mxu0 0
    %1945 = vmatpush1.bf16.msra.mxu0 %v1612
    %1946 = vmatprep.subr.bf16.mxu0 0
    %1947 = vmatpush1.bf16.msra.mxu0 %v1613
    %1948 = vmatprep.subr.bf16.mxu0 0
    %1949 = vmatpush1.bf16.msra.mxu0 %v1614
    %1950 = vmatprep.subr.bf16.mxu0 0
    %1951 = vmatpush1.bf16.msra.mxu0 %v1615
    %1952 = vmatprep.subr.bf16.mxu0 0
    %1953 = vmatpush1.bf16.msra.mxu0 %v1616
    %1954 = vmatprep.subr.bf16.mxu0 0
    %1955 = vmatpush1.bf16.msra.mxu0 %v1617
    %1956 = vmatprep.subr.bf16.mxu0 0
    %1957 = vmatpush1.bf16.msra.mxu0 %v1618
    %1958 = vmatprep.subr.bf16.mxu0 0
    %1959 = vmatpush1.bf16.msra.mxu0 %v1619
    %1960 = vmatprep.subr.bf16.mxu0 0
    %1961 = vmatpush1.bf16.msra.mxu0 %v1620
    %1962 = vmatprep.subr.bf16.mxu0 0
    %1963 = vmatpush1.bf16.msra.mxu0 %v1621
    %1964 = vmatprep.subr.bf16.mxu0 0
    %1965 = vmatpush1.bf16.msra.mxu0 %v1622
    %1966 = vmatprep.subr.bf16.mxu0 0
    %1967 = vmatpush1.bf16.msra.mxu0 %v1623
    %1968 = vmatprep.mubr.bf16.mxu0 %v777
    %1969 = vmatmul.mubr.bf16.gmra.mrb[0].mxu0 %v776
    %v1970 = vpop.f32.mrb[0].mxu0
    %v1971 = vadd.f32 %v1931, %v1970
    %v1972 = vpop.f32.mrb[0].mxu0
    %v1973 = vpop.f32.mrb[0].mxu0
    %v1974 = vpop.f32.mrb[0].mxu0
    %1975 = vdwg.mxu0
    %1976 = vmatprep.subr.bf16.mxu0 0
    %1977 = vmatpush1.bf16.msra.mxu0 %v1624
    %1978 = vmatprep.subr.bf16.mxu0 0
    %1979 = vmatpush1.bf16.msra.mxu0 %v1625
    %1980 = vmatprep.subr.bf16.mxu0 0
    %1981 = vmatpush1.bf16.msra.mxu0 %v1626
    %1982 = vmatprep.subr.bf16.mxu0 0
    %1983 = vmatpush1.bf16.msra.mxu0 %v1627
    %1984 = vmatprep.subr.bf16.mxu0 0
    %1985 = vmatpush1.bf16.msra.mxu0 %v1628
    %1986 = vmatprep.subr.bf16.mxu0 0
    %1987 = vmatpush1.bf16.msra.mxu0 %v1629
    %1988 = vmatprep.subr.bf16.mxu0 0
    %1989 = vmatpush1.bf16.msra.mxu0 %v1630
    %1990 = vmatprep.subr.bf16.mxu0 0
    %1991 = vmatpush1.bf16.msra.mxu0 %v1631
    %1992 = vmatprep.subr.bf16.mxu0 0
    %1993 = vmatpush1.bf16.msra.mxu0 %v1632
    %1994 = vmatprep.subr.bf16.mxu0 0
    %1995 = vmatpush1.bf16.msra.mxu0 %v1633
    %1996 = vmatprep.subr.bf16.mxu0 0
    %1997 = vmatpush1.bf16.msra.mxu0 %v1634
    %1998 = vmatprep.subr.bf16.mxu0 0
    %1999 = vmatpush1.bf16.msra.mxu0 %v1635
    %2000 = vmatprep.subr.bf16.mxu0 0
    %2001 = vmatpush1.bf16.msra.mxu0 %v1636
    %2002 = vmatprep.subr.bf16.mxu0 0
    %2003 = vmatpush1.bf16.msra.mxu0 %v1637
    %2004 = vmatprep.subr.bf16.mxu0 0
    %2005 = vmatpush1.bf16.msra.mxu0 %v1638
    %2006 = vmatprep.subr.bf16.mxu0 0
    %2007 = vmatpush1.bf16.msra.mxu0 %v1639
    %2008 = vmatprep.mubr.bf16.mxu0 %v779
    %2009 = vmatmul.mubr.bf16.gmra.mrb[0].mxu0 %v778
    %v2010 = vpop.f32.mrb[0].mxu0
    %v2011 = vadd.f32 %v1971, %v2010
    %v2012 = vpop.f32.mrb[0].mxu0
    %v2013 = vpop.f32.mrb[0].mxu0
    %v2014 = vpop.f32.mrb[0].mxu0
    %2015 = vdwg.mxu0
    %2016 = vmatprep.subr.bf16.mxu0 0
    %2017 = vmatpush1.bf16.msra.mxu0 %v1640
    %2018 = vmatprep.subr.bf16.mxu0 0
    %2019 = vmatpush1.bf16.msra.mxu0 %v1641
    %2020 = vmatprep.subr.bf16.mxu0 0
    %2021 = vmatpush1.bf16.msra.mxu0 %v1642
    %2022 = vmatprep.subr.bf16.mxu0 0
    %2023 = vmatpush1.bf16.msra.mxu0 %v1643
    %2024 = vmatprep.subr.bf16.mxu0 0
    %2025 = vmatpush1.bf16.msra.mxu0 %v1644
    %2026 = vmatprep.subr.bf16.mxu0 0
    %2027 = vmatpush1.bf16.msra.mxu0 %v1645
    %2028 = vmatprep.subr.bf16.mxu0 0
    %2029 = vmatpush1.bf16.msra.mxu0 %v1646
    %2030 = vmatprep.subr.bf16.mxu0 0
    %2031 = vmatpush1.bf16.msra.mxu0 %v1647
    %2032 = vmatprep.subr.bf16.mxu0 0
    %2033 = vmatpush1.bf16.msra.mxu0 %v1648
    %2034 = vmatprep.subr.bf16.mxu0 0
    %2035 = vmatpush1.bf16.msra.mxu0 %v1649
    %2036 = vmatprep.subr.bf16.mxu0 0
    %2037 = vmatpush1.bf16.msra.mxu0 %v1650
    %2038 = vmatprep.subr.bf16.mxu0 0
    %2039 = vmatpush1.bf16.msra.mxu0 %v1651
    %2040 = vmatprep.subr.bf16.mxu0 0
    %2041 = vmatpush1.bf16.msra.mxu0 %v1652
    %2042 = vmatprep.subr.bf16.mxu0 0
    %2043 = vmatpush1.bf16.msra.mxu0 %v1653
    %2044 = vmatprep.subr.bf16.mxu0 0
    %2045 = vmatpush1.bf16.msra.mxu0 %v1654
    %2046 = vmatprep.subr.bf16.mxu0 0
    %2047 = vmatpush1.bf16.msra.mxu0 %v1655
    %2048 = vmatprep.mubr.bf16.mxu0 %v781
    %2049 = vmatmul.mubr.bf16.gmra.mrb[0].mxu0 %v780
    %v2050 = vpop.f32.mrb[0].mxu0
    %v2051 = vadd.f32 %v2011, %v2050
    %v2052 = vpop.f32.mrb[0].mxu0
    %v2053 = vpop.f32.mrb[0].mxu0
    %v2054 = vpop.f32.mrb[0].mxu0
    %2055 = vdwg.mxu0
    %2056 = vmatprep.subr.bf16.mxu0 0
    %2057 = vmatpush1.bf16.msra.mxu0 %v1656
    %2058 = vmatprep.subr.bf16.mxu0 0
    %2059 = vmatpush1.bf16.msra.mxu0 %v1657
    %2060 = vmatprep.subr.bf16.mxu0 0
    %2061 = vmatpush1.bf16.msra.mxu0 %v1658
    %2062 = vmatprep.subr.bf16.mxu0 0
    %2063 = vmatpush1.bf16.msra.mxu0 %v1659
    %2064 = vmatprep.subr.bf16.mxu0 0
    %2065 = vmatpush1.bf16.msra.mxu0 %v1660
    %2066 = vmatprep.subr.bf16.mxu0 0
    %2067 = vmatpush1.bf16.msra.mxu0 %v1661
    %2068 = vmatprep.subr.bf16.mxu0 0
    %2069 = vmatpush1.bf16.msra.mxu0 %v1662
    %2070 = vmatprep.subr.bf16.mxu0 0
    %2071 = vmatpush1.bf16.msra.mxu0 %v1663
    %2072 = vmatprep.subr.bf16.mxu0 0
    %2073 = vmatpush1.bf16.msra.mxu0 %v1664
    %2074 = vmatprep.subr.bf16.mxu0 0
    %2075 = vmatpush1.bf16.msra.mxu0 %v1665
    %2076 = vmatprep.subr.bf16.mxu0 0
    %2077 = vmatpush1.bf16.msra.mxu0 %v1666
    %2078 = vmatprep.subr.bf16.mxu0 0
    %2079 = vmatpush1.bf16.msra.mxu0 %v1667
    %2080 = vmatprep.subr.bf16.mxu0 0
    %2081 = vmatpush1.bf16.msra.mxu0 %v1668
    %2082 = vmatprep.subr.bf16.mxu0 0
    %2083 = vmatpush1.bf16.msra.mxu0 %v1669
    %2084 = vmatprep.subr.bf16.mxu0 0
    %2085 = vmatpush1.bf16.msra.mxu0 %v1670
    %2086 = vmatprep.subr.bf16.mxu0 0
    %2087 = vmatpush1.bf16.msra.mxu0 %v1671
    %2088 = vmatprep.mubr.bf16.mxu0 %v783
    %2089 = vmatmul.mubr.bf16.gmra.mrb[0].mxu0 %v782
    %v2090 = vpop.f32.mrb[0].mxu0
    %v2091 = vadd.f32 %v2051, %v2090
    %v2092 = vpop.f32.mrb[0].mxu0
    %v2093 = vpop.f32.mrb[0].mxu0
    %v2094 = vpop.f32.mrb[0].mxu0
    %2095 = vdwg.mxu0
    %2096 = vmatprep.subr.bf16.mxu0 0
    %2097 = vmatpush1.bf16.msra.mxu0 %v1672
    %2098 = vmatprep.subr.bf16.mxu0 0
    %2099 = vmatpush1.bf16.msra.mxu0 %v1673
    %2100 = vmatprep.subr.bf16.mxu0 0
    %2101 = vmatpush1.bf16.msra.mxu0 %v1674
    %2102 = vmatprep.subr.bf16.mxu0 0
    %2103 = vmatpush1.bf16.msra.mxu0 %v1675
    %2104 = vmatprep.subr.bf16.mxu0 0
    %2105 = vmatpush1.bf16.msra.mxu0 %v1676
    %2106 = vmatprep.subr.bf16.mxu0 0
    %2107 = vmatpush1.bf16.msra.mxu0 %v1677
    %2108 = vmatprep.subr.bf16.mxu0 0
    %2109 = vmatpush1.bf16.msra.mxu0 %v1678
    %2110 = vmatprep.subr.bf16.mxu0 0
    %2111 = vmatpush1.bf16.msra.mxu0 %v1679
    %2112 = vmatprep.subr.bf16.mxu0 0
    %2113 = vmatpush1.bf16.msra.mxu0 %v1680
    %2114 = vmatprep.subr.bf16.mxu0 0
    %2115 = vmatpush1.bf16.msra.mxu0 %v1681
    %2116 = vmatprep.subr.bf16.mxu0 0
    %2117 = vmatpush1.bf16.msra.mxu0 %v1682
    %2118 = vmatprep.subr.bf16.mxu0 0
    %2119 = vmatpush1.bf16.msra.mxu0 %v1683
    %2120 = vmatprep.subr.bf16.mxu0 0
    %2121 = vmatpush1.bf16.msra.mxu0 %v1684
    %2122 = vmatprep.subr.bf16.mxu0 0
    %2123 = vmatpush1.bf16.msra.mxu0 %v1685
    %2124 = vmatprep.subr.bf16.mxu0 0
    %2125 = vmatpush1.bf16.msra.mxu0 %v1686
    %2126 = vmatprep.subr.bf16.mxu0 0
    %2127 = vmatpush1.bf16.msra.mxu0 %v1687
    %2128 = vmatprep.mubr.bf16.mxu0 %v785
    %2129 = vmatmul.mubr.bf16.gmra.mrb[0].mxu0 %v784
    %v2130 = vpop.f32.mrb[0].mxu0
    %v2131 = vadd.f32 %v2091, %v2130
    %v2132 = vpop.f32.mrb[0].mxu0
    %v2133 = vpop.f32.mrb[0].mxu0
    %v2134 = vpop.f32.mrb[0].mxu0
    %2135 = vdwg.mxu0
    %v2136 = vmax.f32 %v2131, 0.0
    %v2137 = vpack.c.bf16 %v2136, %v2136
    %v2138 = vld [vmem:[#allocation4 + $0x400] sm:$0xf]
    %v2139 = vld [vmem:[#allocation4 + $0x404] sm:$0xf]
    %v2140 = vld [vmem:[#allocation4 + $0x408] sm:$0xf]
    %v2141 = vld [vmem:[#allocation4 + $0x40c] sm:$0xf]
    %v2142 = vld [vmem:[#allocation4 + $0x410] sm:$0xf]
    %v2143 = vld [vmem:[#allocation4 + $0x414] sm:$0xf]
    %v2144 = vld [vmem:[#allocation4 + $0x418] sm:$0xf]
    %v2145 = vld [vmem:[#allocation4 + $0x41c] sm:$0xf]
    %v2146 = vld [vmem:[#allocation4 + $0x420] sm:$0xf]
    %v2147 = vld [vmem:[#allocation4 + $0x424] sm:$0xf]
    %v2148 = vld [vmem:[#allocation4 + $0x428] sm:$0xf]
    %v2149 = vld [vmem:[#allocation4 + $0x42c] sm:$0xf]
    %v2150 = vld [vmem:[#allocation4 + $0x430] sm:$0xf]
    %v2151 = vld [vmem:[#allocation4 + $0x434] sm:$0xf]
    %v2152 = vld [vmem:[#allocation4 + $0x438] sm:$0xf]
    %v2153 = vld [vmem:[#allocation4 + $0x43c] sm:$0xf]
    %v2155 = vlaneseq
    %v2156 = vshrl.u32 %v2155, 7
    %v2157 = vsub.s32 0, %v2156
    %v2158 = vrot.slane %v49, %v2157
    %v2176 = vunpack.c.l.b16 %v2138
    %v2177 = vunpack.c.l.b16 %v2139
    %v2178 = vunpack.c.l.b16 %v2140
    %v2179 = vunpack.c.l.b16 %v2141
    %v2180 = vunpack.c.l.b16 %v2142
    %v2181 = vunpack.c.l.b16 %v2143
    %v2182 = vunpack.c.l.b16 %v2144
    %v2183 = vunpack.c.l.b16 %v2145
    %v2184 = vunpack.c.l.b16 %v2146
    %v2185 = vunpack.c.l.b16 %v2147
    %v2186 = vunpack.c.l.b16 %v2148
    %v2187 = vunpack.c.l.b16 %v2149
    %v2188 = vunpack.c.l.b16 %v2150
    %v2189 = vunpack.c.l.b16 %v2151
    %v2190 = vunpack.c.l.b16 %v2152
    %v2191 = vunpack.c.l.b16 %v2153
    %v2192 = vpack.c.b16 %v2177, %v2176
    %v2193 = vpack.c.b16 %v2179, %v2178
    %v2194 = vpack.c.b16 %v2181, %v2180
    %v2195 = vpack.c.b16 %v2183, %v2182
    %v2196 = vpack.c.b16 %v2185, %v2184
    %v2197 = vpack.c.b16 %v2187, %v2186
    %v2198 = vpack.c.b16 %v2189, %v2188
    %v2199 = vpack.c.b16 %v2191, %v2190
    %2208 = vmatprep.subr.bf16.mxu0 0
    %2209 = vmatpush1.bf16.msra.mxu0 %v2192
    %2210 = vmatprep.subr.bf16.mxu0 0
    %2211 = vmatpush1.bf16.msra.mxu0 %v2193
    %2212 = vmatprep.subr.bf16.mxu0 0
    %2213 = vmatpush1.bf16.msra.mxu0 %v2194
    %2214 = vmatprep.subr.bf16.mxu0 0
    %2215 = vmatpush1.bf16.msra.mxu0 %v2195
    %2216 = vmatprep.subr.bf16.mxu0 0
    %2217 = vmatpush1.bf16.msra.mxu0 %v2196
    %2218 = vmatprep.subr.bf16.mxu0 0
    %2219 = vmatpush1.bf16.msra.mxu0 %v2197
    %2220 = vmatprep.subr.bf16.mxu0 0
    %2221 = vmatpush1.bf16.msra.mxu0 %v2198
    %2222 = vmatprep.subr.bf16.mxu0 0
    %2223 = vmatpush1.bf16.msra.mxu0 %v2199
    %2224 = vmatprep.subr.bf16.mxu0 0
    %2225 = vmatpush1.bf16.msra.mxu0 0
    %2226 = vmatprep.subr.bf16.mxu0 0
    %2227 = vmatpush1.bf16.msra.mxu0 0
    %2228 = vmatprep.subr.bf16.mxu0 0
    %2229 = vmatpush1.bf16.msra.mxu0 0
    %2230 = vmatprep.subr.bf16.mxu0 0
    %2231 = vmatpush1.bf16.msra.mxu0 0
    %2232 = vmatprep.subr.bf16.mxu0 0
    %2233 = vmatpush1.bf16.msra.mxu0 0
    %2234 = vmatprep.subr.bf16.mxu0 0
    %2235 = vmatpush1.bf16.msra.mxu0 0
    %2236 = vmatprep.subr.bf16.mxu0 0
    %2237 = vmatpush1.bf16.msra.mxu0 0
    %2238 = vmatprep.subr.bf16.mxu0 0
    %2239 = vmatpush1.bf16.msra.mxu0 0
    %2240 = vmatprep.mubr.bf16.mxu0 0
    %2241 = vmatmul.mubr.bf16.gmra.mrb[0].mxu0 %v2137
    %v2242 = vpop.f32.mrb[0].mxu0
    %v2243 = vadd.f32 %v2158, %v2242
    %v2244 = vpop.f32.mrb[0].mxu0
    %v2245 = vpop.f32.mrb[0].mxu0
    %v2246 = vpop.f32.mrb[0].mxu0
    %2247 = vdwg.mxu0
    %2248 = vmax.xlane.f32.xlu0 %v2243
    %v2249 = vpop.xlane.xlu0 %2248
    %v2250 = vsub.f32 %v2243, %v2249
    %v2251 = vmul.f32 %v2250, 1.442695
    %v2252 = vpow.pop %v2251
    %2253 = vadd.xlane.f32.xlu0 %v2252
    %v2254 = vpop.xlane.xlu0 %2253
    %v2255 = vrcp.pop %v2254
    %v2256 = vmul.f32 %v2252, %v2255
    %2257 = vst [vmem:[%s4] sm:$0xff] %v2256
    // Predicated region
    $region26: #{fwd.1} parent=1 // pred_check
      _
    $region27: #{fwd.1} parent=1 // pred_check_branch
      %2259 = sbr.rel (0) target = $region29
    $region28: #{fwd.1} parent=1 // pred_region
      _
    $region29: #{fwd.1} parent=1 // pred_fallthru
      _
    // Predicated region
    $region30: #{fwd.1} parent=1 // pred_check
      _
    $region31: #{fwd.1} parent=1 // pred_check_branch
      %2261 = sbr.rel (0) target = $region33
    $region32: #{fwd.1} parent=1 // pred_region
      _
    $region33: #{fwd.1} parent=1 // pred_fallthru
      _
    %2262 = vsyncpa [#allocation3], 1
    %2263 = vsyncpa [#allocation5], 1

</llo_original>
